<compile_context>
chip_gen: v6e
topology: v6e:2x2x1
jax: 0.10.0
libtpu: 0.0.40
codegen_flags: <defaults>
</compile_context>

<pallas_src>
from collections import Counter

import numpy as np
import jax
import jax.numpy as jnp
from jax.experimental import pallas as pl
from jax.experimental.pallas import tpu as pltpu

MIB = 1 << 20
# Budget for a VMEM-resident second operand (counted x2 for pipeline buffers)
# chosen so the configuration also fits v7x's 32 MiB scoped / 64 MiB physical VMEM.
RESIDENT_OPERAND_BUDGET = 16 * MIB


# ----------------------------------------------------------------------------
# Tiling helpers
# ----------------------------------------------------------------------------
def _round_up(v, m):
    return ((v + m - 1) // m) * m


def _pow2_tile(extent, cap):
    t = 128
    while t * 2 <= min(extent, cap):
        t *= 2
    return t


def _choose_tiles(n, *, tm_cap=512, tk_cap=512, max_pad_frac=0.25):
    """Pick TM (target tile) and TK (reduction tile): power-of-two multiples of
    128 so both divide n_pad.  Large tiles amortize the ~0.35us per-step
    overhead; padding growth of the dense A (quadratic in n_pad) is bounded,
    and the parallel i axis keeps >= 2 tiles for the v7x megacore."""
    n128 = _round_up(n, 128)
    tk = _pow2_tile(n128, tk_cap)
    tm = _pow2_tile(n128, tm_cap)
    # Bound zero-padding blow-up of the dominant A stream.
    while max(tm, tk) > 128 and _round_up(n128, max(tm, tk)) > n128 * (1 + max_pad_frac):
        if tk >= tm and tk > 128:
            tk //= 2
        else:
            tm //= 2
    # v7x has 2 TensorCores: keep >= 2 tiles along the parallel target axis.
    while tm > 128 and (n128 + tm - 1) // tm < 2:
        tm //= 2
    n_pad = _round_up(n128, max(tm, tk))
    return tm, tk, n_pad


# ----------------------------------------------------------------------------
# Kernel 1: layer-1 propagation for both branches, H@W2 fused at finalize.
#   acc[b, i] += A[b, i, k] @ XW1[k]
#   finalize:  HW2[b, i] = relu(acc[b, i] + b1) @ W2
# ----------------------------------------------------------------------------
def make_layer1_kernel(tk, resident_xw1):
    def kernel(a_ref, xw1_ref, w2_ref, b1_ref, hw2_ref, acc_ref):
        k = pl.program_id(1)

        @pl.when(k == 0)
        def _():
            acc_ref[...] = jnp.zeros_like(acc_ref)

        if resident_xw1:
            off = pl.multiple_of(k * tk, tk)
            xw1 = xw1_ref[pl.ds(off, tk), :]
        else:
            xw1 = xw1_ref[...]

        acc_ref[0] += jnp.dot(a_ref[0], xw1, preferred_element_type=jnp.float32)
        acc_ref[1] += jnp.dot(a_ref[1], xw1, preferred_element_type=jnp.float32)

        @pl.when(k == pl.num_programs(1) - 1)
        def _():
            # Bias + ReLU + fused H @ W2 only at finalize (not per reduction step).
            # TODO(synk): dropout implemented as identity (eval mode); training-mode
            #             dropout would need pltpu.prng_* masking here.
            h = jnp.maximum(acc_ref[...] + b1_ref[...], 0.0).astype(jnp.bfloat16)
            hw2_ref[0] = jnp.dot(h[0], w2_ref[...],
                                 preferred_element_type=jnp.float32).astype(hw2_ref.dtype)
            hw2_ref[1] = jnp.dot(h[1], w2_ref[...],
                                 preferred_element_type=jnp.float32).astype(hw2_ref.dtype)

    return kernel


# ----------------------------------------------------------------------------
# Kernel 2: layer-2 propagation for both branches + 2-way attention softmax.
#   acc[b, i] += A[b, i, k] @ HW2[b, k]
#   finalize:  G/P = acc + b2 ; s = <G/P, dw> ; out = softmax-weighted sum
# ----------------------------------------------------------------------------
def make_layer2_kernel(tk, resident_hw2):
    def kernel(a_ref, hw2_ref, b2_ref, dw_ref, out_ref, acc_ref):
        k = pl.program_id(1)

        @pl.when(k == 0)
        def _():
            acc_ref[...] = jnp.zeros_like(acc_ref)

        if resident_hw2:
            off = pl.multiple_of(k * tk, tk)
            hw2_g = hw2_ref[0, pl.ds(off, tk), :]
            hw2_p = hw2_ref[1, pl.ds(off, tk), :]
        else:
            hw2_g = hw2_ref[0]
            hw2_p = hw2_ref[1]

        acc_ref[0] += jnp.dot(a_ref[0], hw2_g, preferred_element_type=jnp.float32)
        acc_ref[1] += jnp.dot(a_ref[1], hw2_p, preferred_element_type=jnp.float32)

        @pl.when(k == pl.num_programs(1) - 1)
        def _():
            b2 = b2_ref[...]                    # (1, Dp)
            dwv = dw_ref[...]                   # (1, Dp)
            g2 = acc_ref[0] + b2                # (TM, Dp), f32
            p2 = acc_ref[1] + b2                # (TM, Dp), f32
            # Attention scores: VPU multiply + lane reduction (no (.,1) MXU matmul).
            # The Linear bias db adds to both scores and cancels in the 2-way softmax.
            s_g = jnp.sum(g2 * dwv, axis=-1, keepdims=True)   # (TM, 1)
            s_p = jnp.sum(p2 * dwv, axis=-1, keepdims=True)   # (TM, 1)
            m = jnp.maximum(s_g, s_p)
            e_g = jnp.exp(s_g - m)
            e_p = jnp.exp(s_p - m)
            inv = pl.reciprocal(e_g + e_p, approx=True)        # EUP slot
            out_ref[...] = (g2 * (e_g * inv) + p2 * (e_p * inv)).astype(out_ref.dtype)

    return kernel


# ----------------------------------------------------------------------------
# Wrapper: padding, dtype casting, tiled pallas_calls.
# ----------------------------------------------------------------------------
def _pad2(a, rows, cols):
    a = jnp.asarray(a, jnp.float32)
    return jnp.pad(a, ((0, rows - a.shape[0]), (0, cols - a.shape[1])))


def _compiler_params(vmem_need_bytes):
    kwargs = dict(dimension_semantics=("parallel", "arbitrary"))
    if vmem_need_bytes > 30 * MIB:
        # v5e/v6e have 128 MiB physical VMEM; v7x only 64 MiB per TC -> cap at 48 MiB.
        kwargs["vmem_limit_bytes"] = min(int(vmem_need_bytes * 1.25), 48 * MIB)
    return pltpu.CompilerParams(**kwargs)


def encoder_forward(a_gcn, a_ppmi, x, w1, b1, w2, b2, dw):
    """Full Encoder forward.  a_gcn/a_ppmi are dense normalized (N, N) matrices
    (M[target, source]); dw is the dense_weight Linear weight of shape (Dout, 1)."""
    n, _ = x.shape
    h_dim = w1.shape[1]
    d_out = w2.shape[1]

    tm, tk, n_pad = _choose_tiles(n)
    h_p = _round_up(h_dim, 128)
    d_p = _round_up(d_out, 128)

    # bf16 MXU operands, f32 accumulation inside the kernels.
    # TODO(synk): on v7x an fp8(e4m3) A stack (int8+scale on v5e/v6e) would halve
    #             the dominant HBM stream; kept bf16 pending accuracy validation.
    a_stack = jnp.stack([_pad2(a_gcn, n_pad, n_pad),
                         _pad2(a_ppmi, n_pad, n_pad)]).astype(jnp.bfloat16)

    # Feature transform X @ W1 hoisted out of the reduction loop: shared by both
    # branches and every target tile, computed once at the unpadded d_in.
    xw1 = jnp.dot(jnp.asarray(x, jnp.float32), jnp.asarray(w1, jnp.float32),
                  preferred_element_type=jnp.float32)
    xw1_p = _pad2(xw1, n_pad, h_p).astype(jnp.bfloat16)

    w2_p = _pad2(jnp.asarray(w2), h_p, d_p).astype(jnp.bfloat16)
    b1_p = _pad2(jnp.asarray(b1).reshape(1, h_dim), 1, h_p)          # f32
    b2_p = _pad2(jnp.asarray(b2).reshape(1, d_out), 1, d_p)          # f32
    dw_row = _pad2(jnp.asarray(dw).reshape(1, d_out), 1, d_p)        # f32

    grid = (n_pad // tm, n_pad // tk)

    # --- Layer 1: HW2[b] = relu(A[b] @ XW1 + b1) @ W2 -----------------------
    xw1_bytes = n_pad * h_p * 2
    resident_xw1 = 2 * xw1_bytes <= RESIDENT_OPERAND_BUDGET   # x2: pipeline buffers
    if resident_xw1:
        xw1_spec = pl.BlockSpec((n_pad, h_p), lambda i, k: (0, 0))   # DMA'd once
    else:
        xw1_spec = pl.BlockSpec((tk, h_p), lambda i, k: (k, 0))      # streamed

    l1_vmem = (2 * (2 * tm * tk * 2)                              # A blocks x2 bufs
               + (2 * xw1_bytes if resident_xw1 else 2 * tk * h_p * 2)
               + 2 * (2 * tm * d_p * 2)                           # HW2 out x2 bufs
               + 2 * tm * h_p * 4                                 # f32 accumulator
               + 2 * (h_p * d_p * 2 + h_p * 4))                   # W2 / b1 consts
    l1_cost = pl.CostEstimate(
        flops=int(2 * 2 * n_pad * n_pad * h_p + 2 * 2 * n_pad * h_p * d_p),
        transcendentals=0,
        bytes_accessed=int(a_stack.size * 2 + xw1_bytes + 2 * n_pad * d_p * 2
                           + h_p * d_p * 2 + h_p * 4))

    hw2_stack = pl.pallas_call(
        make_layer1_kernel(tk, resident_xw1),
        out_shape=jax.ShapeDtypeStruct((2, n_pad, d_p), jnp.bfloat16),
        grid_spec=pltpu.PrefetchScalarGridSpec(
            num_scalar_prefetch=0,
            grid=grid,
            in_specs=[
                pl.BlockSpec((2, tm, tk), lambda i, k: (0, i, k)),   # A
                xw1_spec,                                            # XW1
                pl.BlockSpec((h_p, d_p), lambda i, k: (0, 0)),       # W2
                pl.BlockSpec((1, h_p), lambda i, k: (0, 0)),         # b1
            ],
            out_specs=pl.BlockSpec((2, tm, d_p), lambda i, k: (0, i, 0)),
            scratch_shapes=[pltpu.VMEM((2, tm, h_p), jnp.float32)],
        ),
        compiler_params=_compiler_params(l1_vmem),
        cost_estimate=l1_cost,
    )(a_stack, xw1_p, w2_p, b1_p)

    # --- Layer 2 + attention -------------------------------------------------
    hw2_bytes = 2 * n_pad * d_p * 2
    resident_hw2 = 2 * hw2_bytes <= RESIDENT_OPERAND_BUDGET
    if resident_hw2:
        hw2_spec = pl.BlockSpec((2, n_pad, d_p), lambda i, k: (0, 0, 0))   # DMA'd once
    else:
        hw2_spec = pl.BlockSpec((2, tk, d_p), lambda i, k: (0, k, 0))      # streamed

    l2_vmem = (2 * (2 * tm * tk * 2)
               + (2 * hw2_bytes if resident_hw2 else 2 * 2 * tk * d_p * 2)
               + 2 * (tm * d_p * 2)                               # bf16 out x2 bufs
               + 2 * tm * d_p * 4                                 # f32 accumulator
               + 2 * (2 * d_p * 4))                               # b2 / dw consts
    l2_cost = pl.CostEstimate(
        flops=int(2 * 2 * n_pad * n_pad * d_p),
        transcendentals=int(2 * n_pad),
        bytes_accessed=int(a_stack.size * 2 + hw2_bytes + n_pad * d_p * 2 + 2 * d_p * 4))

    out_pad = pl.pallas_call(
        make_layer2_kernel(tk, resident_hw2),
        out_shape=jax.ShapeDtypeStruct((n_pad, d_p), jnp.bfloat16),
        grid_spec=pltpu.PrefetchScalarGridSpec(
            num_scalar_prefetch=0,
            grid=grid,
            in_specs=[
                pl.BlockSpec((2, tm, tk), lambda i, k: (0, i, k)),   # A
                hw2_spec,                                            # HW2 stack
                pl.BlockSpec((1, d_p), lambda i, k: (0, 0)),         # b2
                pl.BlockSpec((1, d_p), lambda i, k: (0, 0)),         # dw
            ],
            out_specs=pl.BlockSpec((tm, d_p), lambda i, k: (i, 0)),
            scratch_shapes=[pltpu.VMEM((2, tm, d_p), jnp.float32)],
        ),
        compiler_params=_compiler_params(l2_vmem),
        cost_estimate=l2_cost,
    )(a_stack, hw2_stack, b2_p, dw_row)

    # Kernel writes bf16 (halved HBM writeback); widen the tiny final slice to f32.
    return out_pad[:n, :d_out].astype(jnp.float32)


# ----------------------------------------------------------------------------
# Host-side graph preprocessing (mirrors GraphConvolution.norm / PPMI norm).
# ----------------------------------------------------------------------------
def _sym_norm_dense(src, dst, w, num_nodes):
    """add_remaining_self_loops(fill=1) + D^-1/2 A D^-1/2, densified as
    M[target, source] so propagation is a dense matmul (PyG 'add' aggregation)."""
    src, dst, w = list(src), list(dst), list(w)
    have_self = set(s for s, d in zip(src, dst) if s == d)
    for i in range(num_nodes):
        if i not in have_self:
            src.append(i); dst.append(i); w.append(1.0)
    src = np.asarray(src, np.int64)
    dst = np.asarray(dst, np.int64)
    w = np.asarray(w, np.float32)
    deg = np.zeros(num_nodes, np.float32)
    np.add.at(deg, src, w)
    # TODO(synk): reference leaves deg<=0 as NaN via pow(-0.5) (only inf->0);
    #             we zero non-positive degrees to keep the demo finite.
    dinv = np.zeros(num_nodes, np.float32)
    pos = deg > 0
    dinv[pos] = deg[pos] ** -0.5
    norm = dinv[src] * w * dinv[dst]
    a = np.zeros((num_nodes, num_nodes), np.float32)
    np.add.at(a, (dst, src), norm)     # aggregate messages from source into target
    return a


def gcn_norm_dense(edge_index, num_nodes):
    e = edge_index.shape[1]
    return _sym_norm_dense(edge_index[0], edge_index[1],
                           np.ones(e, np.float32), num_nodes)


def ppmi_norm_dense(edge_index, num_nodes, path_len=10, seed=0):
    rng = np.random.RandomState(seed)
    adj = {}
    for i in range(edge_index.shape[1]):
        a, b = int(edge_index[0, i]), int(edge_index[1, i])
        adj.setdefault(a, set()).add(b)
        adj.setdefault(b, set()).add(a)
    adj = {a: list(s) for a, s in adj.items()}

    walk_counters = {}
    for _ in range(40):
        for a in adj:
            cur = a
            length = rng.randint(1, path_len + 1)
            for _ in range(length):
                nbrs = adj[cur]
                cur = nbrs[rng.randint(0, len(nbrs))]
                walk_counters.setdefault(a, Counter())[cur] += 1

    normalized = {a: {b: c / sum(cnt.values()) for b, c in cnt.items()}
                  for a, cnt in walk_counters.items()}
    prob_sums = Counter()
    for a, nc in normalized.items():
        for b, p in nc.items():
            prob_sums[b] += p

    src, dst, w = [], [], []
    for a, nc in normalized.items():
        for b, p in nc.items():
            ppmi = np.log(p / prob_sums[b] * len(prob_sums) / path_len)
            src.append(a); dst.append(b); w.append(ppmi)   # no clamp (as reference)
    return _sym_norm_dense(src, dst, w, num_nodes)


# ----------------------------------------------------------------------------
# Deterministic parameter init (glorot for GCN weights, Linear default-ish).
# ----------------------------------------------------------------------------
def init_params(key, input_dim, hid_dim, output_dim):
    k1, k2, k3 = jax.random.split(key, 3)

    def glorot(k, shape):
        a = np.sqrt(6.0 / (shape[0] + shape[1]))
        return jax.random.uniform(k, shape, jnp.float32, -a, a)

    w1 = glorot(k1, (input_dim, hid_dim))
    b1 = jnp.zeros((hid_dim,), jnp.float32)
    w2 = glorot(k2, (hid_dim, output_dim))
    b2 = jnp.zeros((output_dim,), jnp.float32)
    bound = 1.0 / np.sqrt(output_dim)
    dw = jax.random.uniform(k3, (output_dim, 1), jnp.float32, -bound, bound)
    # dense_weight bias db is omitted: it cancels exactly in the 2-way softmax.
    return w1, b1, w2, b2, dw


if __name__ == "__main__":
    N, INPUT_DIM, HID_DIM, OUTPUT_DIM = 200, 16, 32, 8   # N not a tile multiple: exercises padding
    PATH_LEN = 10

    # Deterministic small graph: ring + a few chords, symmetrized.
    src, dst = [], []
    for i in range(N):
        src += [i, (i + 1) % N]
        dst += [(i + 1) % N, i]
    for i in range(0, N, 3):
        j = (i + 5) % N
        src += [i, j]
        dst += [j, i]
    edge_index = np.stack([np.asarray(src), np.asarray(dst)])   # (2, E)

    key = jax.random.PRNGKey(0)
    kx, kp = jax.random.split(key)
    x = jax.random.normal(kx, (N, INPUT_DIM), jnp.float32)
    w1, b1, w2, b2, dw = init_params(kp, INPUT_DIM, HID_DIM, OUTPUT_DIM)

    a_gcn = jnp.asarray(gcn_norm_dense(edge_index, N))
    a_ppmi = jnp.asarray(ppmi_norm_dense(edge_index, N, path_len=PATH_LEN, seed=0))

    out = encoder_forward(a_gcn, a_ppmi, x, w1, b1, w2, b2, dw)
    out = jax.block_until_ready(out)
    assert out.shape == (N, OUTPUT_DIM) and bool(jnp.all(jnp.isfinite(out)))
    print("KERNEL_OK")
</pallas_src>

<mosaic_0001>
module attributes {stable_mosaic.version = 11 : i64} {
  func.func @kernel(%arg0: i32, %arg1: i32, %arg2: memref<2x128x256xbf16, #tpu.memory_space<vmem>>, %arg3: memref<256x128xbf16, #tpu.memory_space<vmem>>, %arg4: memref<128x128xbf16, #tpu.memory_space<vmem>>, %arg5: memref<1x128xf32, #tpu.memory_space<vmem>>, %arg6: memref<2x128x128xbf16, #tpu.memory_space<vmem>>, %arg7: memref<2x128x128xf32, #tpu.memory_space<vmem>>) attributes {dimension_semantics = [#tpu.dimension_semantics<parallel>, #tpu.dimension_semantics<arbitrary>], iteration_bounds = array<i64: 2, 1>, scalar_prefetch = 0 : i64, scratch_operands = 1 : i64, tpu.core_type = #tpu.core_type<tc>, window_params = [{transform_indices = @transform_0, window_bounds = array<i64: 2, 128, 256>}, {pipeline_mode = #tpu.pipeline_mode<synchronous>, transform_indices = @transform_1, window_bounds = array<i64: 256, 128>}, {pipeline_mode = #tpu.pipeline_mode<synchronous>, transform_indices = @transform_2, window_bounds = array<i64: 128, 128>}, {pipeline_mode = #tpu.pipeline_mode<synchronous>, transform_indices = @transform_3, window_bounds = array<i64: 1, 128>}, {transform_indices = @transform_4, window_bounds = array<i64: 2, 128, 128>}]} {
    %c0_i32 = arith.constant 0 : i32
    %0 = arith.cmpi eq, %arg1, %c0_i32 : i32
    %1 = arith.extui %0 : i1 to i32
    %c0_i32_0 = arith.constant 0 : i32
    %2 = arith.cmpi ne, %1, %c0_i32_0 : i32
    scf.if %2 {
      %cst_21 = arith.constant 0.000000e+00 : f32
      %28 = vector.broadcast %cst_21 : f32 to vector<2x128x128xf32>
      %c0_22 = arith.constant 0 : index
      %c0_23 = arith.constant 0 : index
      %c0_24 = arith.constant 0 : index
      %29 = vector.load %arg7[%c0_22, %c0_23, %c0_24] : memref<2x128x128xf32, #tpu.memory_space<vmem>>, vector<2x128x128xf32>
      tpu.vector_store %arg7[%c0_22, %c0_23, %c0_24], %28 {strides = array<i32>} : memref<2x128x128xf32, #tpu.memory_space<vmem>>, vector<2x128x128xf32>,
    } else {
    }
    %c256_i32 = arith.constant 256 : i32
    %3 = arith.muli %arg1, %c256_i32 : i32
    %4 = tpu.assume_multiple %3, 256 : i32
    %5 = arith.index_cast %4 : i32 to index
    %c0 = arith.constant 0 : index
    %6 = vector.load %arg3[%5, %c0] : memref<256x128xbf16, #tpu.memory_space<vmem>>, vector<256x128xbf16>
    %c0_1 = arith.constant 0 : index
    %c0_2 = arith.constant 0 : index
    %c0_3 = arith.constant 0 : index
    %7 = vector.load %arg7[%c0_1, %c0_2, %c0_3] : memref<2x128x128xf32, #tpu.memory_space<vmem>>, vector<1x128x128xf32>
    %8 = vector.shape_cast %7 : vector<1x128x128xf32> to vector<128x128xf32>
    %c0_4 = arith.constant 0 : index
    %c0_5 = arith.constant 0 : index
    %c0_6 = arith.constant 0 : index
    %9 = vector.load %arg2[%c0_4, %c0_5, %c0_6] : memref<2x128x256xbf16, #tpu.memory_space<vmem>>, vector<1x128x256xbf16>
    %10 = vector.shape_cast %9 : vector<1x128x256xbf16> to vector<128x256xbf16>
    %cst = arith.constant dense<0.000000e+00> : vector<128x128xf32>
    %11 = tpu.matmul %10, %6, %cst {dimension_numbers = #tpu.dot_dimension_numbers<[1], [0], [0], [1], [0, 0, 1, 1], [], []>} : vector<128x256xbf16>, vector<256x128xbf16>, vector<128x128xf32> -> vector<128x128xf32>
    %12 = arith.addf %8, %11 : vector<128x128xf32>
    %c0_7 = arith.constant 0 : index
    %c0_8 = arith.constant 0 : index
    %c0_9 = arith.constant 0 : index
    %13 = vector.load %arg7[%c0_7, %c0_8, %c0_9] : memref<2x128x128xf32, #tpu.memory_space<vmem>>, vector<1x128x128xf32>
    %14 = vector.shape_cast %13 : vector<1x128x128xf32> to vector<128x128xf32>
    %15 = vector.shape_cast %12 : vector<128x128xf32> to vector<1x128x128xf32>
    tpu.vector_store %arg7[%c0_7, %c0_8, %c0_9], %15 {strides = array<i32>} : memref<2x128x128xf32, #tpu.memory_space<vmem>>, vector<1x128x128xf32>,
    %c1 = arith.constant 1 : index
    %c0_10 = arith.constant 0 : index
    %c0_11 = arith.constant 0 : index
    %16 = vector.load %arg7[%c1, %c0_10, %c0_11] : memref<2x128x128xf32, #tpu.memory_space<vmem>>, vector<1x128x128xf32>
    %17 = vector.shape_cast %16 : vector<1x128x128xf32> to vector<128x128xf32>
    %c1_12 = arith.constant 1 : index
    %c0_13 = arith.constant 0 : index
    %c0_14 = arith.constant 0 : index
    %18 = vector.load %arg2[%c1_12, %c0_13, %c0_14] : memref<2x128x256xbf16, #tpu.memory_space<vmem>>, vector<1x128x256xbf16>
    %19 = vector.shape_cast %18 : vector<1x128x256xbf16> to vector<128x256xbf16>
    %cst_15 = arith.constant dense<0.000000e+00> : vector<128x128xf32>
    %20 = tpu.matmul %19, %6, %cst_15 {dimension_numbers = #tpu.dot_dimension_numbers<[1], [0], [0], [1], [0, 0, 1, 1], [], []>} : vector<128x256xbf16>, vector<256x128xbf16>, vector<128x128xf32> -> vector<128x128xf32>
    %21 = arith.addf %17, %20 : vector<128x128xf32>
    %c1_16 = arith.constant 1 : index
    %c0_17 = arith.constant 0 : index
    %c0_18 = arith.constant 0 : index
    %22 = vector.load %arg7[%c1_16, %c0_17, %c0_18] : memref<2x128x128xf32, #tpu.memory_space<vmem>>, vector<1x128x128xf32>
    %23 = vector.shape_cast %22 : vector<1x128x128xf32> to vector<128x128xf32>
    %24 = vector.shape_cast %21 : vector<128x128xf32> to vector<1x128x128xf32>
    tpu.vector_store %arg7[%c1_16, %c0_17, %c0_18], %24 {strides = array<i32>} : memref<2x128x128xf32, #tpu.memory_space<vmem>>, vector<1x128x128xf32>,
    %c0_i32_19 = arith.constant 0 : i32
    %25 = arith.cmpi eq, %arg1, %c0_i32_19 : i32
    %26 = arith.extui %25 : i1 to i32
    %c0_i32_20 = arith.constant 0 : i32
    %27 = arith.cmpi ne, %26, %c0_i32_20 : i32
    scf.if %27 {
      %c0_21 = arith.constant 0 : index
      %c0_22 = arith.constant 0 : index
      %c0_23 = arith.constant 0 : index
      %28 = vector.load %arg7[%c0_21, %c0_22, %c0_23] : memref<2x128x128xf32, #tpu.memory_space<vmem>>, vector<2x128x128xf32>
      %c0_24 = arith.constant 0 : index
      %c0_25 = arith.constant 0 : index
      %29 = vector.load %arg5[%c0_24, %c0_25] : memref<1x128xf32, #tpu.memory_space<vmem>>, vector<1x128xf32>
      %30 = vector.shape_cast %29 : vector<1x128xf32> to vector<1x1x128xf32>
      %31 = vector.broadcast %30 : vector<1x1x128xf32> to vector<2x128x128xf32>
      %32 = arith.addf %28, %31 : vector<2x128x128xf32>
      %cst_26 = arith.constant 0.000000e+00 : f32
      %33 = vector.broadcast %cst_26 : f32 to vector<2x128x128xf32>
      %34 = arith.maximumf %32, %33 : vector<2x128x128xf32>
      %35 = arith.truncf %34 : vector<2x128x128xf32> to vector<2x128x128xbf16>
      %36 = vector.extract_strided_slice %35 {offsets = [0, 0, 0], sizes = [1, 128, 128], strides = [1, 1, 1]} : vector<2x128x128xbf16> to vector<1x128x128xbf16>
      %37 = vector.shape_cast %36 : vector<1x128x128xbf16> to vector<128x128xbf16>
      %c0_27 = arith.constant 0 : index
      %c0_28 = arith.constant 0 : index
      %38 = vector.load %arg4[%c0_27, %c0_28] : memref<128x128xbf16, #tpu.memory_space<vmem>>, vector<128x128xbf16>
      %cst_29 = arith.constant dense<0.000000e+00> : vector<128x128xf32>
      %39 = tpu.matmul %37, %38, %cst_29 {dimension_numbers = #tpu.dot_dimension_numbers<[1], [0], [0], [1], [0, 0, 1, 1], [], []>} : vector<128x128xbf16>, vector<128x128xbf16>, vector<128x128xf32> -> vector<128x128xf32>
      %40 = arith.truncf %39 : vector<128x128xf32> to vector<128x128xbf16>
      %c0_30 = arith.constant 0 : index
      %c0_31 = arith.constant 0 : index
      %c0_32 = arith.constant 0 : index
      %41 = vector.load %arg6[%c0_30, %c0_31, %c0_32] : memref<2x128x128xbf16, #tpu.memory_space<vmem>>, vector<1x128x128xbf16>
      %42 = vector.shape_cast %41 : vector<1x128x128xbf16> to vector<128x128xbf16>
      %43 = vector.shape_cast %40 : vector<128x128xbf16> to vector<1x128x128xbf16>
      tpu.vector_store %arg6[%c0_30, %c0_31, %c0_32], %43 {strides = array<i32>} : memref<2x128x128xbf16, #tpu.memory_space<vmem>>, vector<1x128x128xbf16>,
      %44 = vector.extract_strided_slice %35 {offsets = [1, 0, 0], sizes = [1, 128, 128], strides = [1, 1, 1]} : vector<2x128x128xbf16> to vector<1x128x128xbf16>
      %45 = vector.shape_cast %44 : vector<1x128x128xbf16> to vector<128x128xbf16>
      %c0_33 = arith.constant 0 : index
      %c0_34 = arith.constant 0 : index
      %46 = vector.load %arg4[%c0_33, %c0_34] : memref<128x128xbf16, #tpu.memory_space<vmem>>, vector<128x128xbf16>
      %cst_35 = arith.constant dense<0.000000e+00> : vector<128x128xf32>
      %47 = tpu.matmul %45, %46, %cst_35 {dimension_numbers = #tpu.dot_dimension_numbers<[1], [0], [0], [1], [0, 0, 1, 1], [], []>} : vector<128x128xbf16>, vector<128x128xbf16>, vector<128x128xf32> -> vector<128x128xf32>
      %48 = arith.truncf %47 : vector<128x128xf32> to vector<128x128xbf16>
      %c1_36 = arith.constant 1 : index
      %c0_37 = arith.constant 0 : index
      %c0_38 = arith.constant 0 : index
      %49 = vector.load %arg6[%c1_36, %c0_37, %c0_38] : memref<2x128x128xbf16, #tpu.memory_space<vmem>>, vector<1x128x128xbf16>
      %50 = vector.shape_cast %49 : vector<1x128x128xbf16> to vector<128x128xbf16>
      %51 = vector.shape_cast %48 : vector<128x128xbf16> to vector<1x128x128xbf16>
      tpu.vector_store %arg6[%c1_36, %c0_37, %c0_38], %51 {strides = array<i32>} : memref<2x128x128xbf16, #tpu.memory_space<vmem>>, vector<1x128x128xbf16>,
    } else {
    }
    return
  }
  func.func @transform_0(%arg0: i32, %arg1: i32) -> (i32, i32, i32) {
    %c0_i32 = arith.constant 0 : i32
    %c0_i32_0 = arith.constant 0 : i32
    return %c0_i32, %arg0, %arg1 : i32, i32, i32
  }
  func.func @transform_1(%arg0: i32, %arg1: i32) -> (i32, i32) {
    %c0_i32 = arith.constant 0 : i32
    %c0_i32_0 = arith.constant 0 : i32
    %c0_i32_1 = arith.constant 0 : i32
    return %c0_i32, %c0_i32_0 : i32, i32
  }
  func.func @transform_2(%arg0: i32, %arg1: i32) -> (i32, i32) {
    %c0_i32 = arith.constant 0 : i32
    %c0_i32_0 = arith.constant 0 : i32
    %c0_i32_1 = arith.constant 0 : i32
    return %c0_i32, %c0_i32_0 : i32, i32
  }
  func.func @transform_3(%arg0: i32, %arg1: i32) -> (i32, i32) {
    %c0_i32 = arith.constant 0 : i32
    %c0_i32_0 = arith.constant 0 : i32
    %c0_i32_1 = arith.constant 0 : i32
    return %c0_i32, %c0_i32_0 : i32, i32
  }
  func.func @transform_4(%arg0: i32, %arg1: i32) -> (i32, i32, i32) {
    %c0_i32 = arith.constant 0 : i32
    %c0_i32_0 = arith.constant 0 : i32
    %c0_i32_1 = arith.constant 0 : i32
    return %c0_i32, %arg0, %c0_i32_0 : i32, i32, i32
  }
}

</mosaic_0001>

<llo_original>
// kernel: tpu_custom_call.1
$region0: #{tpu_custom_call.1}
  #allocation0 [shape = 'u32[]', space=smem, size = 0x4, offset = 0x4, fixed_abs, tag = 'smem constant byte address 0x4 - core index']
  #allocation1 [shape = 'u32[144,128]{1,0:T(1,128)}', space=vmem, size = 0x12000, scoped, tag = 'internal scratch']
  #allocation2 [shape = 'f32[2,128,128]{2,1,0:T(8,128)}', space=vmem, size = 0x20000, scoped, tag = 'scratch operand']
  #allocation10 [shape = 's32[]', space=sflag, size = 0x4, offset = 0, fixed_abs, tag = 'sflag constant byte address 0x0 - dummy sync flag']
  #allocation12 [shape = 's32[]', space=sflag, size = 0x4, offset = 0, fixed_abs, tag = 'sflag constant byte address 0x0 - dummy sync flag']
  %s0 = inlined_call_operand.hbm [shape: bf16[2,256,256], index: 0, kind: input, shape index: {}]
  %s1 = inlined_call_operand.hbm [shape: bf16[256,128], index: 1, kind: input, shape index: {}]
  %s2 = inlined_call_operand.hbm [shape: bf16[128,128], index: 2, kind: input, shape index: {}]
  %s3 = inlined_call_operand.vmem [shape: f32[1,128], index: 3, kind: input, shape index: {}]
  %s4 = inlined_call_operand.hbm [shape: bf16[2,256,128], index: 4, kind: output, shape index: {}]
  %s5 = sld [smem:[#allocation0]]
  $region69: #{tpu_custom_call.1} parent=0
    _
  %s7 = ssub.s32 1, %s5
  %s8 = scalar_select 0, %s7, %s5
  $region1: #{tpu_custom_call.1} parent=0
    #allocation3 [shape = 'u8[262144]{0}', space=vmem, size = 0x40000, scoped, tag = 'input window, operand 0']
    #allocation4 [shape = 's32[2]{0}', space=sflag, size = 0x8, scoped, tag = 'scoped memory for tpu_custom_call.1']
    #allocation5 [shape = 's32[2]{0}', space=sflag, size = 0x8, scoped, tag = 'scoped memory for tpu_custom_call.1']
    #allocation6 [shape = 'u8[65536]{0}', space=vmem, size = 0x10000, scoped, tag = 'input window, operand 1, single buffered']
    #allocation7 [shape = 's32[1]{0}', space=sflag, size = 0x4, scoped, tag = 'scoped memory for tpu_custom_call.1']
    #allocation8 [shape = 'u8[32768]{0}', space=vmem, size = 0x8000, scoped, tag = 'input window, operand 2, single buffered']
    #allocation9 [shape = 'u8[131072]{0}', space=vmem, size = 0x20000, scoped, tag = 'output window, operand 0']
    %9 = vsyncpa [#allocation4], 0
    %s10 = scalar_lea.sflag [#allocation4], 1
    %11 = vsyncpa %s10, 0
    %12 = vsyncpa [#allocation7], 0
    %13 = vsyncpa [#allocation5], 0
    %s14 = scalar_lea.sflag [#allocation5], 1
    %15 = vsyncpa %s14, 0
    loop: start=0, step=1, limit=4
    $region2: #{tpu_custom_call.1} parent=1 // loop_pre_header
      _
    $region3: #{tpu_custom_call.1} parent=1 // loop_header
      %s17 = sphi 0, %s21
      %p18 = scmp.ge.s32.totalorder %s17, 4
      %s24 = sphi 0, %s36
      %s25 = sphi 0, %s32
      %s26 = sphi 0, %s24
      %s27 = sphi 0, %s25
      %s28 = sphi 0, %s26
      %s29 = sphi 0, %s27
      %s41 = sphi 0, %s43
      %s44 = sphi 0, %s41
      %s45 = sphi 0, %s44
      %s61 = sphi 0, %s45
      %s65 = sphi 0, %s65
      %s67 = sphi 0, %s65
      %s68 = sphi 0, %s67
      %s82 = sphi 0, %s68
      %s86 = sphi 0, %s86
      %s88 = sphi 0, %s86
      %s89 = sphi 0, %s88
      %s103 = sphi 0, %s89
      %s107 = sphi 0, %s107
      %s109 = sphi 0, %s107
      %s110 = sphi 0, %s109
      %s124 = sphi 0, %s110
      %s130 = sphi 0, %s132
      %s133 = sphi 0, %s130
      %s134 = sphi 0, %s133
      %s150 = sphi 0, %s134
    $region4: #{tpu_custom_call.1} parent=1 // loop_header_branch
      %20 = sbr.rel (%p18) target = $region8
    $region5: #{tpu_custom_call.1} parent=1 // loop_body
      %s22 = ssub.s32 %s17, 1
      %s23 = ssub.s32 %s17, 2
      %s30 = sadd.s32 1, %s25
      %p31 = scmp.ge.s32.totalorder %s30, 1
      %s32 = scalar_select %p31, 0, %s30
      %s33 = sadd.s32 1, %s24
      %s34 = scalar_select %p31, %s33, %s24
      %p35 = scmp.ge.s32.totalorder %s34, 2
      %s36 = scalar_select %p35, 0, %s34
      %s37 = ssub.s32 %s24, %s36
      %s38 = ssub.s32 %s25, %s32
      %s39 = sor.u32 %s37, %s38
      %p40 = scmp.eq.s32.totalorder %s39, 0
      %s42 = sadd.s32 %s41, 1
      %s43 = scalar_select %p40, %s41, %s42
      %p46 = pneg %p40
      %p47 = scmp.eq.s32.totalorder %s17, 1
      %p48 = por %p46, %p47
      %p49 = scmp.ne.s32.totalorder %s41, %s44
      %p50 = scmp.eq.s32.totalorder %s17, 0
      %p51 = por %p49, %p50
      %p52 = scmp.ne.s32.totalorder %s41, %s44
      %p53 = scmp.eq.s32.totalorder %s22, 1
      %p54 = por %p52, %p53
      %p55 = scmp.ne.s32.totalorder %s44, %s45
      %p56 = scmp.eq.s32.totalorder %s22, 0
      %p57 = por %p55, %p56
      %p58 = scmp.ne.s32.totalorder %s44, %s45
      %p59 = scmp.eq.s32.totalorder %s23, 1
      %p60 = por %p58, %p59
      %p62 = scmp.ne.s32.totalorder %s45, %s61
      %p63 = scmp.eq.s32.totalorder %s23, 0
      %p64 = por %p62, %p63
      %s66 = sadd.s32 %s65, 1
      %p69 = scmp.eq.s32.totalorder %s17, 1
      %p70 = scmp.ne.s32.totalorder %s65, %s67
      %p71 = scmp.eq.s32.totalorder %s17, 0
      %p72 = por %p70, %p71
      %p73 = scmp.ne.s32.totalorder %s65, %s67
      %p74 = scmp.eq.s32.totalorder %s22, 1
      %p75 = por %p73, %p74
      %p76 = scmp.ne.s32.totalorder %s67, %s68
      %p77 = scmp.eq.s32.totalorder %s22, 0
      %p78 = por %p76, %p77
      %p79 = scmp.ne.s32.totalorder %s67, %s68
      %p80 = scmp.eq.s32.totalorder %s23, 1
      %p81 = por %p79, %p80
      %p83 = scmp.ne.s32.totalorder %s68, %s82
      %p84 = scmp.eq.s32.totalorder %s23, 0
      %p85 = por %p83, %p84
      %s87 = sadd.s32 %s86, 1
      %p90 = scmp.eq.s32.totalorder %s17, 1
      %p91 = scmp.ne.s32.totalorder %s86, %s88
      %p92 = scmp.eq.s32.totalorder %s17, 0
      %p93 = por %p91, %p92
      %p94 = scmp.ne.s32.totalorder %s86, %s88
      %p95 = scmp.eq.s32.totalorder %s22, 1
      %p96 = por %p94, %p95
      %p97 = scmp.ne.s32.totalorder %s88, %s89
      %p98 = scmp.eq.s32.totalorder %s22, 0
      %p99 = por %p97, %p98
      %p100 = scmp.ne.s32.totalorder %s88, %s89
      %p101 = scmp.eq.s32.totalorder %s23, 1
      %p102 = por %p100, %p101
      %p104 = scmp.ne.s32.totalorder %s89, %s103
      %p105 = scmp.eq.s32.totalorder %s23, 0
      %p106 = por %p104, %p105
      %s108 = sadd.s32 %s107, 1
      %p111 = scmp.eq.s32.totalorder %s17, 1
      %p112 = scmp.ne.s32.totalorder %s107, %s109
      %p113 = scmp.eq.s32.totalorder %s17, 0
      %p114 = por %p112, %p113
      %p115 = scmp.ne.s32.totalorder %s107, %s109
      %p116 = scmp.eq.s32.totalorder %s22, 1
      %p117 = por %p115, %p116
      %p118 = scmp.ne.s32.totalorder %s109, %s110
      %p119 = scmp.eq.s32.totalorder %s22, 0
      %p120 = por %p118, %p119
      %p121 = scmp.ne.s32.totalorder %s109, %s110
      %p122 = scmp.eq.s32.totalorder %s23, 1
      %p123 = por %p121, %p122
      %p125 = scmp.ne.s32.totalorder %s110, %s124
      %p126 = scmp.eq.s32.totalorder %s23, 0
      %p127 = por %p125, %p126
      %s128 = ssub.s32 %s24, %s36
      %p129 = scmp.eq.s32.totalorder %s128, 0
      %s131 = sadd.s32 %s130, 1
      %s132 = scalar_select %p129, %s130, %s131
      %p135 = pneg %p129
      %p136 = scmp.eq.s32.totalorder %s17, 1
      %p137 = por %p135, %p136
      %p138 = scmp.ne.s32.totalorder %s130, %s133
      %p139 = scmp.eq.s32.totalorder %s17, 0
      %p140 = por %p138, %p139
      %p141 = scmp.ne.s32.totalorder %s130, %s133
      %p142 = scmp.eq.s32.totalorder %s22, 1
      %p143 = por %p141, %p142
      %p144 = scmp.ne.s32.totalorder %s133, %s134
      %p145 = scmp.eq.s32.totalorder %s22, 0
      %p146 = por %p144, %p145
      %p147 = scmp.ne.s32.totalorder %s133, %s134
      %p148 = scmp.eq.s32.totalorder %s23, 1
      %p149 = por %p147, %p148
      %p151 = scmp.ne.s32.totalorder %s134, %s150
      %p152 = scmp.eq.s32.totalorder %s23, 0
      %p153 = por %p151, %p152
      %p154 = scmp.le.s32.totalorder 1, %s17
      %p155 = scmp.lt.s32.totalorder %s17, 3
      %p156 = pnand %p154, %p155
      %p157 = pneg %p156
      // Predicated region
      $region9: #{tpu_custom_call.1} parent=5 // pred_check
        _
      $region10: #{tpu_custom_call.1} parent=5 // pred_check_branch
        %159 = sbr.rel (%p156) target = $region12
      $region11: #{tpu_custom_call.1} parent=5 // pred_region
        %s160 = ssub.s32 %s17, 1
        // Predicated region
        $region13: #{tpu_custom_call.1} parent=11 // pred_check
          %p161 = pneg %p78
        $region14: #{tpu_custom_call.1} parent=11 // pred_check_branch
          %163 = sbr.rel (%p161) target = $region16
        $region15: #{tpu_custom_call.1} parent=11 // pred_region
          %s165 = ssub.s32 2048, 2048
          %166 = vsyncadd [#allocation7], %s165
          %s167 = sshll.u32 [#allocation6], 4
          %s168 = int_to_ptr.vmem [resolvable:$true] %s167
          %173 = dma.hbm_to_vmem [thread:$0]  %s1, 2048, %s168, [#allocation7], 64, 64, 4
        $region16: #{tpu_custom_call.1} parent=11 // pred_fallthru
          _
        // Predicated region
        $region17: #{tpu_custom_call.1} parent=11 // pred_check
          %p174 = pneg %p99
        $region18: #{tpu_custom_call.1} parent=11 // pred_check_branch
          %176 = sbr.rel (%p174) target = $region20
        $region19: #{tpu_custom_call.1} parent=11 // pred_region
          %s178 = ssub.s32 1024, 1024
          %179 = vsyncadd [#allocation7], %s178
          %s180 = sshll.u32 [#allocation8], 4
          %s181 = int_to_ptr.vmem [resolvable:$true] %s180
          %186 = dma.hbm_to_vmem [thread:$0]  %s2, 1024, %s181, [#allocation7], 64, 64, 4
        $region20: #{tpu_custom_call.1} parent=11 // pred_fallthru
          _
        // Predicated region
        $region21: #{tpu_custom_call.1} parent=11 // pred_check
          %p187 = pneg %p120
        $region22: #{tpu_custom_call.1} parent=11 // pred_check_branch
          %189 = sbr.rel (%p187) target = $region24
        $region23: #{tpu_custom_call.1} parent=11 // pred_region
          _
        $region24: #{tpu_custom_call.1} parent=11 // pred_fallthru
          _
      $region12: #{tpu_custom_call.1} parent=5 // pred_fallthru
        _
      %p190 = scmp.lt.s32.totalorder %s17, 2
      // Predicated region
      $region25: #{tpu_custom_call.1} parent=5 // pred_check
        %p191 = pneg %p190
      $region26: #{tpu_custom_call.1} parent=5 // pred_check_branch
        %193 = sbr.rel (%p191) target = $region28
      $region27: #{tpu_custom_call.1} parent=5 // pred_region
        // Predicated region
        $region29: #{tpu_custom_call.1} parent=27 // pred_check
          %p194 = pneg %p51
        $region30: #{tpu_custom_call.1} parent=27 // pred_check_branch
          %196 = sbr.rel (%p194) target = $region32
        $region31: #{tpu_custom_call.1} parent=27 // pred_region
          #allocation11 [shape = 'u32[6]{0}', space=smem, size = 0x18, scoped, tag = 'DMA stride descriptor']
          %s197 = sand.u32 %s41, 1
          %s198 = scalar_lea.sflag [#allocation4], %s197
          %s199 = sand.u32 %s41, 1
          %s200 = smul.addr %s199, 256
          %s201 = scalar_lea.vmem [#allocation3], %s200
          %s202 = smul.u32 16, %s24
          %s203 = smul.u32 2, %s25
          %s205 = ssub.s32 4096, 4096
          %206 = vsyncadd %s198, %s205
          %s207 = smul.addr %s202, 2
          %s208 = sadd.s32 %s203, %s207
          %s209 = smul.addr %s208, 64
          %s210 = scalar_lea.hbm %s0, %s209
          %s212 = sshll.u32 1, 14
          %s213 = sxor.u32 4294967295, %s212
          %s215 = sld [smem:[#allocation0]]
          %s216 = sadd.s32 2, %s215
          %s218 = sshll.u32 7, 26
          %s219 = sxor.u32 4294967295, %s218
          %s220 = sand.u32 0, %s219
          %s221 = sshll.u32 %s216, 26
          %s222 = sor.u32 %s220, %s221
          %s223 = sshll.u32 %s201, 4
          %s224 = int_to_ptr.vmem [resolvable:$true] %s223
          %230 = sst [smem:[#allocation11]] 4096
          %s231 = scalar_lea.smem [#allocation11], 1
          %232 = sst [smem:[%s231]] 2048
          %s233 = scalar_lea.smem [#allocation11], 2
          %234 = sst [smem:[%s233]] 16
          %s235 = scalar_lea.smem [#allocation11], 3
          %236 = sst [smem:[%s235]] 128
          %s237 = scalar_lea.smem [#allocation11], 4
          %238 = sst [smem:[%s237]] 128
          %s239 = scalar_lea.smem [#allocation11], 5
          %240 = sst [smem:[%s239]] 8
          %242 = dma.general %s210, 4096, %s224, %s198, 131072, [#allocation11], %s222, 0
        $region32: #{tpu_custom_call.1} parent=27 // pred_fallthru
          _
      $region28: #{tpu_custom_call.1} parent=5 // pred_fallthru
        _
      %p243 = scmp.le.s32.totalorder 1, %s17
      %p244 = scmp.lt.s32.totalorder %s17, 3
      %p245 = pnand %p243, %p244
      %p246 = pneg %p245
      // Predicated region
      $region33: #{tpu_custom_call.1} parent=5 // pred_check
        _
      $region34: #{tpu_custom_call.1} parent=5 // pred_check_branch
        %248 = sbr.rel (%p245) target = $region36
      $region35: #{tpu_custom_call.1} parent=5 // pred_region
        %s249 = ssub.s32 %s17, 1
        %s250 = sand.u32 %s44, 1
        %s251 = scalar_lea.sflag [#allocation4], %s250
        %s252 = sand.u32 %s44, 1
        %s253 = smul.addr %s252, 256
        %s254 = scalar_lea.vmem [#allocation3], %s253
        // Predicated region
        $region37: #{tpu_custom_call.1} parent=35 // pred_check
          %p255 = pneg %p57
        $region38: #{tpu_custom_call.1} parent=35 // pred_check_branch
          %257 = sbr.rel (%p255) target = $region40
        $region39: #{tpu_custom_call.1} parent=35 // pred_region
          %258 = dma.done %s251, 4096
        $region40: #{tpu_custom_call.1} parent=35 // pred_fallthru
          _
        // Predicated region
        $region41: #{tpu_custom_call.1} parent=35 // pred_check
          %p259 = pneg %p78
        $region42: #{tpu_custom_call.1} parent=35 // pred_check_branch
          %261 = sbr.rel (%p259) target = $region44
        $region43: #{tpu_custom_call.1} parent=35 // pred_region
          %262 = dma.done [#allocation7], 2048
        $region44: #{tpu_custom_call.1} parent=35 // pred_fallthru
          _
        // Predicated region
        $region45: #{tpu_custom_call.1} parent=35 // pred_check
          %p263 = pneg %p99
        $region46: #{tpu_custom_call.1} parent=35 // pred_check_branch
          %265 = sbr.rel (%p263) target = $region48
        $region47: #{tpu_custom_call.1} parent=35 // pred_region
          %266 = dma.done [#allocation7], 1024
        $region48: #{tpu_custom_call.1} parent=35 // pred_fallthru
          _
        %s267 = sand.u32 %s44, 1
        %s268 = scalar_lea.sflag [#allocation4], %s267
        %s269 = sand.u32 %s44, 1
        %s270 = smul.addr %s269, 256
        %s271 = scalar_lea.vmem [#allocation3], %s270
        %p272 = pneg %p57
        %p273 = pneg %p54
        %p274 = pneg %p78
        %p275 = pneg %p75
        %p276 = pneg %p99
        %p277 = pneg %p96
        %p278 = pneg %p120
        %p279 = pneg %p117
        %p280 = pneg %p146
        %p281 = pneg %p143
        %s282 = sand.u32 %s133, 1
        %s283 = scalar_lea.sflag [#allocation5], %s282
        %s284 = sand.u32 %s133, 1
        %s285 = smul.addr %s284, 128
        %s286 = scalar_lea.vmem [#allocation9], %s285
        %s287 = smul.u32 16, %s26
        %s288 = smul.u32 2, %s27
        %s289 = smul.u32 16, %s26
        %p291 = scmp.eq.s32.totalorder %s27, 0
        // Predicated region
        $region49: #{tpu_custom_call.1} parent=35 // pred_check
          %p292 = pneg %p291
        $region50: #{tpu_custom_call.1} parent=35 // pred_check_branch
          %294 = sbr.rel (%p292) target = $region52
        $region51: #{tpu_custom_call.1} parent=35 // pred_region
          %295 = vst [vmem:[#allocation2] sm:$0xff] 0.0
          %296 = vst [vmem:[#allocation2 + $0x8] sm:$0xff] 0.0
          %297 = vst [vmem:[#allocation2 + $0x10] sm:$0xff] 0.0
          %298 = vst [vmem:[#allocation2 + $0x18] sm:$0xff] 0.0
          %299 = vst [vmem:[#allocation2 + $0x20] sm:$0xff] 0.0
          %300 = vst [vmem:[#allocation2 + $0x28] sm:$0xff] 0.0
          %301 = vst [vmem:[#allocation2 + $0x30] sm:$0xff] 0.0
          %302 = vst [vmem:[#allocation2 + $0x38] sm:$0xff] 0.0
          %303 = vst [vmem:[#allocation2 + $0x40] sm:$0xff] 0.0
          %304 = vst [vmem:[#allocation2 + $0x48] sm:$0xff] 0.0
          %305 = vst [vmem:[#allocation2 + $0x50] sm:$0xff] 0.0
          %306 = vst [vmem:[#allocation2 + $0x58] sm:$0xff] 0.0
          %307 = vst [vmem:[#allocation2 + $0x60] sm:$0xff] 0.0
          %308 = vst [vmem:[#allocation2 + $0x68] sm:$0xff] 0.0
          %309 = vst [vmem:[#allocation2 + $0x70] sm:$0xff] 0.0
          %310 = vst [vmem:[#allocation2 + $0x78] sm:$0xff] 0.0
          %311 = vst [vmem:[#allocation2 + $0x80] sm:$0xff] 0.0
          %312 = vst [vmem:[#allocation2 + $0x88] sm:$0xff] 0.0
          %313 = vst [vmem:[#allocation2 + $0x90] sm:$0xff] 0.0
          %314 = vst [vmem:[#allocation2 + $0x98] sm:$0xff] 0.0
          %315 = vst [vmem:[#allocation2 + $0xa0] sm:$0xff] 0.0
          %316 = vst [vmem:[#allocation2 + $0xa8] sm:$0xff] 0.0
          %317 = vst [vmem:[#allocation2 + $0xb0] sm:$0xff] 0.0
          %318 = vst [vmem:[#allocation2 + $0xb8] sm:$0xff] 0.0
          %319 = vst [vmem:[#allocation2 + $0xc0] sm:$0xff] 0.0
          %320 = vst [vmem:[#allocation2 + $0xc8] sm:$0xff] 0.0
          %321 = vst [vmem:[#allocation2 + $0xd0] sm:$0xff] 0.0
          %322 = vst [vmem:[#allocation2 + $0xd8] sm:$0xff] 0.0
          %323 = vst [vmem:[#allocation2 + $0xe0] sm:$0xff] 0.0
          %324 = vst [vmem:[#allocation2 + $0xe8] sm:$0xff] 0.0
          %325 = vst [vmem:[#allocation2 + $0xf0] sm:$0xff] 0.0
          %326 = vst [vmem:[#allocation2 + $0xf8] sm:$0xff] 0.0
        $region52: #{tpu_custom_call.1} parent=35 // pred_fallthru
          _
        %s327 = smul.u32 %s27, 256
        %s328 = sshra.s32 %s327, 3
        %s329 = sand.u32 %s327, 7
        %s330 = smul.addr %s328, 4
        %s331 = scalar_lea.vmem [#allocation6], %s330
        %v332 = vld [vmem:[%s331] sm:$0xf]
        %v333 = vld [vmem:[%s331 + $0x4] sm:$0xf]
        %v334 = vld [vmem:[%s331 + $0x8] sm:$0xf]
        %v335 = vld [vmem:[%s331 + $0xc] sm:$0xf]
        %v336 = vld [vmem:[%s331 + $0x10] sm:$0xf]
        %v337 = vld [vmem:[%s331 + $0x14] sm:$0xf]
        %v338 = vld [vmem:[%s331 + $0x18] sm:$0xf]
        %v339 = vld [vmem:[%s331 + $0x1c] sm:$0xf]
        %v340 = vld [vmem:[%s331 + $0x20] sm:$0xf]
        %v341 = vld [vmem:[%s331 + $0x24] sm:$0xf]
        %v342 = vld [vmem:[%s331 + $0x28] sm:$0xf]
        %v343 = vld [vmem:[%s331 + $0x2c] sm:$0xf]
        %v344 = vld [vmem:[%s331 + $0x30] sm:$0xf]
        %v345 = vld [vmem:[%s331 + $0x34] sm:$0xf]
        %v346 = vld [vmem:[%s331 + $0x38] sm:$0xf]
        %v347 = vld [vmem:[%s331 + $0x3c] sm:$0xf]
        %v348 = vld [vmem:[%s331 + $0x40] sm:$0xf]
        %v349 = vld [vmem:[%s331 + $0x44] sm:$0xf]
        %v350 = vld [vmem:[%s331 + $0x48] sm:$0xf]
        %v351 = vld [vmem:[%s331 + $0x4c] sm:$0xf]
        %v352 = vld [vmem:[%s331 + $0x50] sm:$0xf]
        %v353 = vld [vmem:[%s331 + $0x54] sm:$0xf]
        %v354 = vld [vmem:[%s331 + $0x58] sm:$0xf]
        %v355 = vld [vmem:[%s331 + $0x5c] sm:$0xf]
        %v356 = vld [vmem:[%s331 + $0x60] sm:$0xf]
        %v357 = vld [vmem:[%s331 + $0x64] sm:$0xf]
        %v358 = vld [vmem:[%s331 + $0x68] sm:$0xf]
        %v359 = vld [vmem:[%s331 + $0x6c] sm:$0xf]
        %v360 = vld [vmem:[%s331 + $0x70] sm:$0xf]
        %v361 = vld [vmem:[%s331 + $0x74] sm:$0xf]
        %v362 = vld [vmem:[%s331 + $0x78] sm:$0xf]
        %v363 = vld [vmem:[%s331 + $0x7c] sm:$0xf]
        %v364 = vld [vmem:[#allocation2] sm:$0xff]
        %v365 = vld [vmem:[#allocation2 + $0x8] sm:$0xff]
        %v366 = vld [vmem:[#allocation2 + $0x10] sm:$0xff]
        %v367 = vld [vmem:[#allocation2 + $0x18] sm:$0xff]
        %v368 = vld [vmem:[#allocation2 + $0x20] sm:$0xff]
        %v369 = vld [vmem:[#allocation2 + $0x28] sm:$0xff]
        %v370 = vld [vmem:[#allocation2 + $0x30] sm:$0xff]
        %v371 = vld [vmem:[#allocation2 + $0x38] sm:$0xff]
        %v372 = vld [vmem:[#allocation2 + $0x40] sm:$0xff]
        %v373 = vld [vmem:[#allocation2 + $0x48] sm:$0xff]
        %v374 = vld [vmem:[#allocation2 + $0x50] sm:$0xff]
        %v375 = vld [vmem:[#allocation2 + $0x58] sm:$0xff]
        %v376 = vld [vmem:[#allocation2 + $0x60] sm:$0xff]
        %v377 = vld [vmem:[#allocation2 + $0x68] sm:$0xff]
        %v378 = vld [vmem:[#allocation2 + $0x70] sm:$0xff]
        %v379 = vld [vmem:[#allocation2 + $0x78] sm:$0xff]
        %v380 = vld [vmem:[%s254] sm:$0xff]
        %v381 = vld [vmem:[%s254 + $0x8] sm:$0xff]
        %v382 = vld [vmem:[%s254 + $0x10] sm:$0xff]
        %v383 = vld [vmem:[%s254 + $0x18] sm:$0xff]
        %v384 = vld [vmem:[%s254 + $0x20] sm:$0xff]
        %v385 = vld [vmem:[%s254 + $0x28] sm:$0xff]
        %v386 = vld [vmem:[%s254 + $0x30] sm:$0xff]
        %v387 = vld [vmem:[%s254 + $0x38] sm:$0xff]
        %v388 = vld [vmem:[%s254 + $0x40] sm:$0xff]
        %v389 = vld [vmem:[%s254 + $0x48] sm:$0xff]
        %v390 = vld [vmem:[%s254 + $0x50] sm:$0xff]
        %v391 = vld [vmem:[%s254 + $0x58] sm:$0xff]
        %v392 = vld [vmem:[%s254 + $0x60] sm:$0xff]
        %v393 = vld [vmem:[%s254 + $0x68] sm:$0xff]
        %v394 = vld [vmem:[%s254 + $0x70] sm:$0xff]
        %v395 = vld [vmem:[%s254 + $0x78] sm:$0xff]
        %v412 = vunpack.c.l.b16 %v380
        %v413 = vunpack.c.h.b16 %v380
        %v414 = vunpack.c.l.b16 %v381
        %v415 = vunpack.c.h.b16 %v381
        %v416 = vunpack.c.l.b16 %v382
        %v417 = vunpack.c.h.b16 %v382
        %v418 = vunpack.c.l.b16 %v383
        %v419 = vunpack.c.h.b16 %v383
        %v420 = vunpack.c.l.b16 %v384
        %v421 = vunpack.c.h.b16 %v384
        %v422 = vunpack.c.l.b16 %v385
        %v423 = vunpack.c.h.b16 %v385
        %v424 = vunpack.c.l.b16 %v386
        %v425 = vunpack.c.h.b16 %v386
        %v426 = vunpack.c.l.b16 %v387
        %v427 = vunpack.c.h.b16 %v387
        %v428 = vunpack.c.l.b16 %v388
        %v429 = vunpack.c.h.b16 %v388
        %v430 = vunpack.c.l.b16 %v389
        %v431 = vunpack.c.h.b16 %v389
        %v432 = vunpack.c.l.b16 %v390
        %v433 = vunpack.c.h.b16 %v390
        %v434 = vunpack.c.l.b16 %v391
        %v435 = vunpack.c.h.b16 %v391
        %v436 = vunpack.c.l.b16 %v392
        %v437 = vunpack.c.h.b16 %v392
        %v438 = vunpack.c.l.b16 %v393
        %v439 = vunpack.c.h.b16 %v393
        %v440 = vunpack.c.l.b16 %v394
        %v441 = vunpack.c.h.b16 %v394
        %v442 = vunpack.c.l.b16 %v395
        %v443 = vunpack.c.h.b16 %v395
        %v444 = vpack.c.b16 %v414, %v412
        %v445 = vpack.c.b16 %v415, %v413
        %v446 = vpack.c.b16 %v418, %v416
        %v447 = vpack.c.b16 %v419, %v417
        %v448 = vpack.c.b16 %v422, %v420
        %v449 = vpack.c.b16 %v423, %v421
        %v450 = vpack.c.b16 %v426, %v424
        %v451 = vpack.c.b16 %v427, %v425
        %v452 = vpack.c.b16 %v430, %v428
        %v453 = vpack.c.b16 %v431, %v429
        %v454 = vpack.c.b16 %v434, %v432
        %v455 = vpack.c.b16 %v435, %v433
        %v456 = vpack.c.b16 %v438, %v436
        %v457 = vpack.c.b16 %v439, %v437
        %v458 = vpack.c.b16 %v442, %v440
        %v459 = vpack.c.b16 %v443, %v441
        %v508 = vunpack.c.l.b16 %v332
        %v509 = vunpack.c.l.b16 %v333
        %v510 = vunpack.c.l.b16 %v334
        %v511 = vunpack.c.l.b16 %v335
        %v512 = vunpack.c.l.b16 %v336
        %v513 = vunpack.c.l.b16 %v337
        %v514 = vunpack.c.l.b16 %v338
        %v515 = vunpack.c.l.b16 %v339
        %v516 = vunpack.c.l.b16 %v340
        %v517 = vunpack.c.l.b16 %v341
        %v518 = vunpack.c.l.b16 %v342
        %v519 = vunpack.c.l.b16 %v343
        %v520 = vunpack.c.l.b16 %v344
        %v521 = vunpack.c.l.b16 %v345
        %v522 = vunpack.c.l.b16 %v346
        %v523 = vunpack.c.l.b16 %v347
        %v524 = vunpack.c.l.b16 %v348
        %v525 = vunpack.c.l.b16 %v349
        %v526 = vunpack.c.l.b16 %v350
        %v527 = vunpack.c.l.b16 %v351
        %v528 = vunpack.c.l.b16 %v352
        %v529 = vunpack.c.l.b16 %v353
        %v530 = vunpack.c.l.b16 %v354
        %v531 = vunpack.c.l.b16 %v355
        %v532 = vunpack.c.l.b16 %v356
        %v533 = vunpack.c.l.b16 %v357
        %v534 = vunpack.c.l.b16 %v358
        %v535 = vunpack.c.l.b16 %v359
        %v536 = vunpack.c.l.b16 %v360
        %v537 = vunpack.c.l.b16 %v361
        %v538 = vunpack.c.l.b16 %v362
        %v539 = vunpack.c.l.b16 %v363
        %v540 = vpack.c.b16 %v509, %v508
        %v541 = vpack.c.b16 %v511, %v510
        %v542 = vpack.c.b16 %v513, %v512
        %v543 = vpack.c.b16 %v515, %v514
        %v544 = vpack.c.b16 %v517, %v516
        %v545 = vpack.c.b16 %v519, %v518
        %v546 = vpack.c.b16 %v521, %v520
        %v547 = vpack.c.b16 %v523, %v522
        %v548 = vpack.c.b16 %v525, %v524
        %v549 = vpack.c.b16 %v527, %v526
        %v550 = vpack.c.b16 %v529, %v528
        %v551 = vpack.c.b16 %v531, %v530
        %v552 = vpack.c.b16 %v533, %v532
        %v553 = vpack.c.b16 %v535, %v534
        %v554 = vpack.c.b16 %v537, %v536
        %v555 = vpack.c.b16 %v539, %v538
        %572 = vmatprep.subr.bf16.mxu0 0
        %573 = vmatpush1.bf16.msra.mxu0 %v547
        %574 = vmatprep.subr.bf16.mxu0 0
        %575 = vmatpush1.bf16.msra.mxu0 %v546
        %576 = vmatprep.subr.bf16.mxu0 0
        %577 = vmatpush1.bf16.msra.mxu0 %v545
        %578 = vmatprep.subr.bf16.mxu0 0
        %579 = vmatpush1.bf16.msra.mxu0 %v544
        %580 = vmatprep.subr.bf16.mxu0 0
        %581 = vmatpush1.bf16.msra.mxu0 %v543
        %582 = vmatprep.subr.bf16.mxu0 0
        %583 = vmatpush1.bf16.msra.mxu0 %v542
        %584 = vmatprep.subr.bf16.mxu0 0
        %585 = vmatpush1.bf16.msra.mxu0 %v541
        %586 = vmatprep.subr.bf16.mxu0 0
        %587 = vmatpush1.bf16.msra.mxu0 %v540
        %588 = vmatprep.subr.bf16.mxu0 0
        %589 = vmatpush2.bf16.msra.mxu0 %v555
        %590 = vmatprep.subr.bf16.mxu0 0
        %591 = vmatpush2.bf16.msra.mxu0 %v554
        %592 = vmatprep.subr.bf16.mxu0 0
        %593 = vmatpush2.bf16.msra.mxu0 %v553
        %594 = vmatprep.subr.bf16.mxu0 0
        %595 = vmatpush2.bf16.msra.mxu0 %v552
        %596 = vmatprep.subr.bf16.mxu0 0
        %597 = vmatpush2.bf16.msra.mxu0 %v551
        %598 = vmatprep.subr.bf16.mxu0 0
        %599 = vmatpush2.bf16.msra.mxu0 %v550
        %600 = vmatprep.subr.bf16.mxu0 0
        %601 = vmatpush2.bf16.msra.mxu0 %v549
        %602 = vmatprep.subr.bf16.mxu0 0
        %603 = vmatpush2.bf16.msra.mxu0 %v548
        %604 = vmatprep.mubr.bf16.mxu0 %v445
        %605 = vmatmul.mubr.bf16.gmra.mxu0 %v444
        %v606 = vpop.f32.mrf.mxu0
        %v607 = vadd.f32 0.0, %v606
        %v608 = vpop.f32.mrf.mxu0
        %v609 = vpop.f32.mrf.mxu0
        %v610 = vadd.f32 0.0, %v609
        %v611 = vpop.f32.mrf.mxu0
        %612 = vmatprep.mubr.bf16.mxu0 %v447
        %613 = vmatmul.mubr.bf16.gmra.mxu0 %v446
        %v614 = vpop.f32.mrf.mxu0
        %v615 = vadd.f32 0.0, %v614
        %v616 = vpop.f32.mrf.mxu0
        %v617 = vpop.f32.mrf.mxu0
        %v618 = vadd.f32 0.0, %v617
        %v619 = vpop.f32.mrf.mxu0
        %620 = vmatprep.mubr.bf16.mxu0 %v449
        %621 = vmatmul.mubr.bf16.gmra.mxu0 %v448
        %v622 = vpop.f32.mrf.mxu0
        %v623 = vadd.f32 0.0, %v622
        %v624 = vpop.f32.mrf.mxu0
        %v625 = vpop.f32.mrf.mxu0
        %v626 = vadd.f32 0.0, %v625
        %v627 = vpop.f32.mrf.mxu0
        %628 = vmatprep.mubr.bf16.mxu0 %v451
        %629 = vmatmul.mubr.bf16.gmra.mxu0 %v450
        %v630 = vpop.f32.mrf.mxu0
        %v631 = vadd.f32 0.0, %v630
        %v632 = vpop.f32.mrf.mxu0
        %v633 = vpop.f32.mrf.mxu0
        %v634 = vadd.f32 0.0, %v633
        %v635 = vpop.f32.mrf.mxu0
        %636 = vmatprep.mubr.bf16.mxu0 %v453
        %637 = vmatmul.mubr.bf16.gmra.mxu0 %v452
        %v638 = vpop.f32.mrf.mxu0
        %v639 = vadd.f32 0.0, %v638
        %v640 = vpop.f32.mrf.mxu0
        %v641 = vpop.f32.mrf.mxu0
        %v642 = vadd.f32 0.0, %v641
        %v643 = vpop.f32.mrf.mxu0
        %644 = vmatprep.mubr.bf16.mxu0 %v455
        %645 = vmatmul.mubr.bf16.gmra.mxu0 %v454
        %v646 = vpop.f32.mrf.mxu0
        %v647 = vadd.f32 0.0, %v646
        %v648 = vpop.f32.mrf.mxu0
        %v649 = vpop.f32.mrf.mxu0
        %v650 = vadd.f32 0.0, %v649
        %v651 = vpop.f32.mrf.mxu0
        %652 = vmatprep.mubr.bf16.mxu0 %v457
        %653 = vmatmul.mubr.bf16.gmra.mxu0 %v456
        %v654 = vpop.f32.mrf.mxu0
        %v655 = vadd.f32 0.0, %v654
        %v656 = vpop.f32.mrf.mxu0
        %v657 = vpop.f32.mrf.mxu0
        %v658 = vadd.f32 0.0, %v657
        %v659 = vpop.f32.mrf.mxu0
        %660 = vmatprep.mubr.bf16.mxu0 %v459
        %661 = vmatmul.mubr.bf16.gmra.mxu0 %v458
        %v662 = vpop.f32.mrf.mxu0
        %v663 = vadd.f32 0.0, %v662
        %v664 = vpop.f32.mrf.mxu0
        %v665 = vpop.f32.mrf.mxu0
        %v666 = vadd.f32 0.0, %v665
        %v667 = vpop.f32.mrf.mxu0
        %668 = vdwg.mxu0
        %v669 = vadd.f32 %v364, %v607
        %v670 = vadd.f32 %v365, %v610
        %v671 = vadd.f32 %v366, %v615
        %v672 = vadd.f32 %v367, %v618
        %v673 = vadd.f32 %v368, %v623
        %v674 = vadd.f32 %v369, %v626
        %v675 = vadd.f32 %v370, %v631
        %v676 = vadd.f32 %v371, %v634
        %v677 = vadd.f32 %v372, %v639
        %v678 = vadd.f32 %v373, %v642
        %v679 = vadd.f32 %v374, %v647
        %v680 = vadd.f32 %v375, %v650
        %v681 = vadd.f32 %v376, %v655
        %v682 = vadd.f32 %v377, %v658
        %v683 = vadd.f32 %v378, %v663
        %v684 = vadd.f32 %v379, %v666
        %685 = vst [vmem:[#allocation2] sm:$0xff] %v669
        %686 = vst [vmem:[#allocation2 + $0x8] sm:$0xff] %v670
        %687 = vst [vmem:[#allocation2 + $0x10] sm:$0xff] %v671
        %688 = vst [vmem:[#allocation2 + $0x18] sm:$0xff] %v672
        %689 = vst [vmem:[#allocation2 + $0x20] sm:$0xff] %v673
        %690 = vst [vmem:[#allocation2 + $0x28] sm:$0xff] %v674
        %691 = vst [vmem:[#allocation2 + $0x30] sm:$0xff] %v675
        %692 = vst [vmem:[#allocation2 + $0x38] sm:$0xff] %v676
        %693 = vst [vmem:[#allocation2 + $0x40] sm:$0xff] %v677
        %694 = vst [vmem:[#allocation2 + $0x48] sm:$0xff] %v678
        %695 = vst [vmem:[#allocation2 + $0x50] sm:$0xff] %v679
        %696 = vst [vmem:[#allocation2 + $0x58] sm:$0xff] %v680
        %697 = vst [vmem:[#allocation2 + $0x60] sm:$0xff] %v681
        %698 = vst [vmem:[#allocation2 + $0x68] sm:$0xff] %v682
        %699 = vst [vmem:[#allocation2 + $0x70] sm:$0xff] %v683
        %700 = vst [vmem:[#allocation2 + $0x78] sm:$0xff] %v684
        %s701 = scalar_lea.vmem [#allocation2], 128
        %v702 = vld [vmem:[%s701] sm:$0xff]
        %v703 = vld [vmem:[%s701 + $0x8] sm:$0xff]
        %v704 = vld [vmem:[%s701 + $0x10] sm:$0xff]
        %v705 = vld [vmem:[%s701 + $0x18] sm:$0xff]
        %v706 = vld [vmem:[%s701 + $0x20] sm:$0xff]
        %v707 = vld [vmem:[%s701 + $0x28] sm:$0xff]
        %v708 = vld [vmem:[%s701 + $0x30] sm:$0xff]
        %v709 = vld [vmem:[%s701 + $0x38] sm:$0xff]
        %v710 = vld [vmem:[%s701 + $0x40] sm:$0xff]
        %v711 = vld [vmem:[%s701 + $0x48] sm:$0xff]
        %v712 = vld [vmem:[%s701 + $0x50] sm:$0xff]
        %v713 = vld [vmem:[%s701 + $0x58] sm:$0xff]
        %v714 = vld [vmem:[%s701 + $0x60] sm:$0xff]
        %v715 = vld [vmem:[%s701 + $0x68] sm:$0xff]
        %v716 = vld [vmem:[%s701 + $0x70] sm:$0xff]
        %v717 = vld [vmem:[%s701 + $0x78] sm:$0xff]
        %s718 = scalar_lea.vmem %s254, 128 [#allocation3]
        %v719 = vld [vmem:[%s718] sm:$0xff]
        %v720 = vld [vmem:[%s718 + $0x8] sm:$0xff]
        %v721 = vld [vmem:[%s718 + $0x10] sm:$0xff]
        %v722 = vld [vmem:[%s718 + $0x18] sm:$0xff]
        %v723 = vld [vmem:[%s718 + $0x20] sm:$0xff]
        %v724 = vld [vmem:[%s718 + $0x28] sm:$0xff]
        %v725 = vld [vmem:[%s718 + $0x30] sm:$0xff]
        %v726 = vld [vmem:[%s718 + $0x38] sm:$0xff]
        %v727 = vld [vmem:[%s718 + $0x40] sm:$0xff]
        %v728 = vld [vmem:[%s718 + $0x48] sm:$0xff]
        %v729 = vld [vmem:[%s718 + $0x50] sm:$0xff]
        %v730 = vld [vmem:[%s718 + $0x58] sm:$0xff]
        %v731 = vld [vmem:[%s718 + $0x60] sm:$0xff]
        %v732 = vld [vmem:[%s718 + $0x68] sm:$0xff]
        %v733 = vld [vmem:[%s718 + $0x70] sm:$0xff]
        %v734 = vld [vmem:[%s718 + $0x78] sm:$0xff]
        %v751 = vunpack.c.l.b16 %v719
        %v752 = vunpack.c.h.b16 %v719
        %v753 = vunpack.c.l.b16 %v720
        %v754 = vunpack.c.h.b16 %v720
        %v755 = vunpack.c.l.b16 %v721
        %v756 = vunpack.c.h.b16 %v721
        %v757 = vunpack.c.l.b16 %v722
        %v758 = vunpack.c.h.b16 %v722
        %v759 = vunpack.c.l.b16 %v723
        %v760 = vunpack.c.h.b16 %v723
        %v761 = vunpack.c.l.b16 %v724
        %v762 = vunpack.c.h.b16 %v724
        %v763 = vunpack.c.l.b16 %v725
        %v764 = vunpack.c.h.b16 %v725
        %v765 = vunpack.c.l.b16 %v726
        %v766 = vunpack.c.h.b16 %v726
        %v767 = vunpack.c.l.b16 %v727
        %v768 = vunpack.c.h.b16 %v727
        %v769 = vunpack.c.l.b16 %v728
        %v770 = vunpack.c.h.b16 %v728
        %v771 = vunpack.c.l.b16 %v729
        %v772 = vunpack.c.h.b16 %v729
        %v773 = vunpack.c.l.b16 %v730
        %v774 = vunpack.c.h.b16 %v730
        %v775 = vunpack.c.l.b16 %v731
        %v776 = vunpack.c.h.b16 %v731
        %v777 = vunpack.c.l.b16 %v732
        %v778 = vunpack.c.h.b16 %v732
        %v779 = vunpack.c.l.b16 %v733
        %v780 = vunpack.c.h.b16 %v733
        %v781 = vunpack.c.l.b16 %v734
        %v782 = vunpack.c.h.b16 %v734
        %v783 = vpack.c.b16 %v753, %v751
        %v784 = vpack.c.b16 %v754, %v752
        %v785 = vpack.c.b16 %v757, %v755
        %v786 = vpack.c.b16 %v758, %v756
        %v787 = vpack.c.b16 %v761, %v759
        %v788 = vpack.c.b16 %v762, %v760
        %v789 = vpack.c.b16 %v765, %v763
        %v790 = vpack.c.b16 %v766, %v764
        %v791 = vpack.c.b16 %v769, %v767
        %v792 = vpack.c.b16 %v770, %v768
        %v793 = vpack.c.b16 %v773, %v771
        %v794 = vpack.c.b16 %v774, %v772
        %v795 = vpack.c.b16 %v777, %v775
        %v796 = vpack.c.b16 %v778, %v776
        %v797 = vpack.c.b16 %v781, %v779
        %v798 = vpack.c.b16 %v782, %v780
        %815 = vmatprep.subr.bf16.mxu0 0
        %816 = vmatpush1.bf16.msra.mxu0 %v547
        %817 = vmatprep.subr.bf16.mxu0 0
        %818 = vmatpush1.bf16.msra.mxu0 %v546
        %819 = vmatprep.subr.bf16.mxu0 0
        %820 = vmatpush1.bf16.msra.mxu0 %v545
        %821 = vmatprep.subr.bf16.mxu0 0
        %822 = vmatpush1.bf16.msra.mxu0 %v544
        %823 = vmatprep.subr.bf16.mxu0 0
        %824 = vmatpush1.bf16.msra.mxu0 %v543
        %825 = vmatprep.subr.bf16.mxu0 0
        %826 = vmatpush1.bf16.msra.mxu0 %v542
        %827 = vmatprep.subr.bf16.mxu0 0
        %828 = vmatpush1.bf16.msra.mxu0 %v541
        %829 = vmatprep.subr.bf16.mxu0 0
        %830 = vmatpush1.bf16.msra.mxu0 %v540
        %831 = vmatprep.subr.bf16.mxu0 0
        %832 = vmatpush2.bf16.msra.mxu0 %v555
        %833 = vmatprep.subr.bf16.mxu0 0
        %834 = vmatpush2.bf16.msra.mxu0 %v554
        %835 = vmatprep.subr.bf16.mxu0 0
        %836 = vmatpush2.bf16.msra.mxu0 %v553
        %837 = vmatprep.subr.bf16.mxu0 0
        %838 = vmatpush2.bf16.msra.mxu0 %v552
        %839 = vmatprep.subr.bf16.mxu0 0
        %840 = vmatpush2.bf16.msra.mxu0 %v551
        %841 = vmatprep.subr.bf16.mxu0 0
        %842 = vmatpush2.bf16.msra.mxu0 %v550
        %843 = vmatprep.subr.bf16.mxu0 0
        %844 = vmatpush2.bf16.msra.mxu0 %v549
        %845 = vmatprep.subr.bf16.mxu0 0
        %846 = vmatpush2.bf16.msra.mxu0 %v548
        %847 = vmatprep.mubr.bf16.mxu0 %v784
        %848 = vmatmul.mubr.bf16.gmra.mxu0 %v783
        %v849 = vpop.f32.mrf.mxu0
        %v850 = vadd.f32 0.0, %v849
        %v851 = vpop.f32.mrf.mxu0
        %v852 = vpop.f32.mrf.mxu0
        %v853 = vadd.f32 0.0, %v852
        %v854 = vpop.f32.mrf.mxu0
        %855 = vmatprep.mubr.bf16.mxu0 %v786
        %856 = vmatmul.mubr.bf16.gmra.mxu0 %v785
        %v857 = vpop.f32.mrf.mxu0
        %v858 = vadd.f32 0.0, %v857
        %v859 = vpop.f32.mrf.mxu0
        %v860 = vpop.f32.mrf.mxu0
        %v861 = vadd.f32 0.0, %v860
        %v862 = vpop.f32.mrf.mxu0
        %863 = vmatprep.mubr.bf16.mxu0 %v788
        %864 = vmatmul.mubr.bf16.gmra.mxu0 %v787
        %v865 = vpop.f32.mrf.mxu0
        %v866 = vadd.f32 0.0, %v865
        %v867 = vpop.f32.mrf.mxu0
        %v868 = vpop.f32.mrf.mxu0
        %v869 = vadd.f32 0.0, %v868
        %v870 = vpop.f32.mrf.mxu0
        %871 = vmatprep.mubr.bf16.mxu0 %v790
        %872 = vmatmul.mubr.bf16.gmra.mxu0 %v789
        %v873 = vpop.f32.mrf.mxu0
        %v874 = vadd.f32 0.0, %v873
        %v875 = vpop.f32.mrf.mxu0
        %v876 = vpop.f32.mrf.mxu0
        %v877 = vadd.f32 0.0, %v876
        %v878 = vpop.f32.mrf.mxu0
        %879 = vmatprep.mubr.bf16.mxu0 %v792
        %880 = vmatmul.mubr.bf16.gmra.mxu0 %v791
        %v881 = vpop.f32.mrf.mxu0
        %v882 = vadd.f32 0.0, %v881
        %v883 = vpop.f32.mrf.mxu0
        %v884 = vpop.f32.mrf.mxu0
        %v885 = vadd.f32 0.0, %v884
        %v886 = vpop.f32.mrf.mxu0
        %887 = vmatprep.mubr.bf16.mxu0 %v794
        %888 = vmatmul.mubr.bf16.gmra.mxu0 %v793
        %v889 = vpop.f32.mrf.mxu0
        %v890 = vadd.f32 0.0, %v889
        %v891 = vpop.f32.mrf.mxu0
        %v892 = vpop.f32.mrf.mxu0
        %v893 = vadd.f32 0.0, %v892
        %v894 = vpop.f32.mrf.mxu0
        %895 = vmatprep.mubr.bf16.mxu0 %v796
        %896 = vmatmul.mubr.bf16.gmra.mxu0 %v795
        %v897 = vpop.f32.mrf.mxu0
        %v898 = vadd.f32 0.0, %v897
        %v899 = vpop.f32.mrf.mxu0
        %v900 = vpop.f32.mrf.mxu0
        %v901 = vadd.f32 0.0, %v900
        %v902 = vpop.f32.mrf.mxu0
        %903 = vmatprep.mubr.bf16.mxu0 %v798
        %904 = vmatmul.mubr.bf16.gmra.mxu0 %v797
        %v905 = vpop.f32.mrf.mxu0
        %v906 = vadd.f32 0.0, %v905
        %v907 = vpop.f32.mrf.mxu0
        %v908 = vpop.f32.mrf.mxu0
        %v909 = vadd.f32 0.0, %v908
        %v910 = vpop.f32.mrf.mxu0
        %911 = vdwg.mxu0
        %v912 = vadd.f32 %v702, %v850
        %v913 = vadd.f32 %v703, %v853
        %v914 = vadd.f32 %v704, %v858
        %v915 = vadd.f32 %v705, %v861
        %v916 = vadd.f32 %v706, %v866
        %v917 = vadd.f32 %v707, %v869
        %v918 = vadd.f32 %v708, %v874
        %v919 = vadd.f32 %v709, %v877
        %v920 = vadd.f32 %v710, %v882
        %v921 = vadd.f32 %v711, %v885
        %v922 = vadd.f32 %v712, %v890
        %v923 = vadd.f32 %v713, %v893
        %v924 = vadd.f32 %v714, %v898
        %v925 = vadd.f32 %v715, %v901
        %v926 = vadd.f32 %v716, %v906
        %v927 = vadd.f32 %v717, %v909
        %928 = vst [vmem:[%s701] sm:$0xff] %v912
        %929 = vst [vmem:[%s701 + $0x8] sm:$0xff] %v913
        %930 = vst [vmem:[%s701 + $0x10] sm:$0xff] %v914
        %931 = vst [vmem:[%s701 + $0x18] sm:$0xff] %v915
        %932 = vst [vmem:[%s701 + $0x20] sm:$0xff] %v916
        %933 = vst [vmem:[%s701 + $0x28] sm:$0xff] %v917
        %934 = vst [vmem:[%s701 + $0x30] sm:$0xff] %v918
        %935 = vst [vmem:[%s701 + $0x38] sm:$0xff] %v919
        %936 = vst [vmem:[%s701 + $0x40] sm:$0xff] %v920
        %937 = vst [vmem:[%s701 + $0x48] sm:$0xff] %v921
        %938 = vst [vmem:[%s701 + $0x50] sm:$0xff] %v922
        %939 = vst [vmem:[%s701 + $0x58] sm:$0xff] %v923
        %940 = vst [vmem:[%s701 + $0x60] sm:$0xff] %v924
        %941 = vst [vmem:[%s701 + $0x68] sm:$0xff] %v925
        %942 = vst [vmem:[%s701 + $0x70] sm:$0xff] %v926
        %943 = vst [vmem:[%s701 + $0x78] sm:$0xff] %v927
        // Predicated region
        $region53: #{tpu_custom_call.1} parent=35 // pred_check
          %p944 = pneg %p291
        $region54: #{tpu_custom_call.1} parent=35 // pred_check_branch
          %946 = sbr.rel (%p944) target = $region56
        $region55: #{tpu_custom_call.1} parent=35 // pred_region
          %v947 = vld [vmem:[#allocation2] sm:$0xff]
          %v948 = vld [vmem:[#allocation2 + $0x8] sm:$0xff]
          %v949 = vld [vmem:[#allocation2 + $0x10] sm:$0xff]
          %v950 = vld [vmem:[#allocation2 + $0x18] sm:$0xff]
          %v951 = vld [vmem:[#allocation2 + $0x20] sm:$0xff]
          %v952 = vld [vmem:[#allocation2 + $0x28] sm:$0xff]
          %v953 = vld [vmem:[#allocation2 + $0x30] sm:$0xff]
          %v954 = vld [vmem:[#allocation2 + $0x38] sm:$0xff]
          %v955 = vld [vmem:[#allocation2 + $0x40] sm:$0xff]
          %v956 = vld [vmem:[#allocation2 + $0x48] sm:$0xff]
          %v957 = vld [vmem:[#allocation2 + $0x50] sm:$0xff]
          %v958 = vld [vmem:[#allocation2 + $0x58] sm:$0xff]
          %v959 = vld [vmem:[#allocation2 + $0x60] sm:$0xff]
          %v960 = vld [vmem:[#allocation2 + $0x68] sm:$0xff]
          %v961 = vld [vmem:[#allocation2 + $0x70] sm:$0xff]
          %v962 = vld [vmem:[#allocation2 + $0x78] sm:$0xff]
          %v963 = vld [vmem:[#allocation2 + $0x80] sm:$0xff]
          %v964 = vld [vmem:[#allocation2 + $0x88] sm:$0xff]
          %v965 = vld [vmem:[#allocation2 + $0x90] sm:$0xff]
          %v966 = vld [vmem:[#allocation2 + $0x98] sm:$0xff]
          %v967 = vld [vmem:[#allocation2 + $0xa0] sm:$0xff]
          %v968 = vld [vmem:[#allocation2 + $0xa8] sm:$0xff]
          %v969 = vld [vmem:[#allocation2 + $0xb0] sm:$0xff]
          %v970 = vld [vmem:[#allocation2 + $0xb8] sm:$0xff]
          %v971 = vld [vmem:[#allocation2 + $0xc0] sm:$0xff]
          %v972 = vld [vmem:[#allocation2 + $0xc8] sm:$0xff]
          %v973 = vld [vmem:[#allocation2 + $0xd0] sm:$0xff]
          %v974 = vld [vmem:[#allocation2 + $0xd8] sm:$0xff]
          %v975 = vld [vmem:[#allocation2 + $0xe0] sm:$0xff]
          %v976 = vld [vmem:[#allocation2 + $0xe8] sm:$0xff]
          %v977 = vld [vmem:[#allocation2 + $0xf0] sm:$0xff]
          %v978 = vld [vmem:[#allocation2 + $0xf8] sm:$0xff]
          %v979 = vld [vmem:[%s3] sm:$0x1]
          %v981 = vlaneseq
          %v982 = vshrl.u32 %v981, 7
          %v983 = vsub.s32 0, %v982
          %v984 = vrot.slane %v979, %v983
          %v986 = vadd.f32 %v947, %v984
          %v987 = vadd.f32 %v948, %v984
          %v988 = vadd.f32 %v949, %v984
          %v989 = vadd.f32 %v950, %v984
          %v990 = vadd.f32 %v951, %v984
          %v991 = vadd.f32 %v952, %v984
          %v992 = vadd.f32 %v953, %v984
          %v993 = vadd.f32 %v954, %v984
          %v994 = vadd.f32 %v955, %v984
          %v995 = vadd.f32 %v956, %v984
          %v996 = vadd.f32 %v957, %v984
          %v997 = vadd.f32 %v958, %v984
          %v998 = vadd.f32 %v959, %v984
          %v999 = vadd.f32 %v960, %v984
          %v1000 = vadd.f32 %v961, %v984
          %v1001 = vadd.f32 %v962, %v984
          %v1002 = vadd.f32 %v963, %v984
          %v1003 = vadd.f32 %v964, %v984
          %v1004 = vadd.f32 %v965, %v984
          %v1005 = vadd.f32 %v966, %v984
          %v1006 = vadd.f32 %v967, %v984
          %v1007 = vadd.f32 %v968, %v984
          %v1008 = vadd.f32 %v969, %v984
          %v1009 = vadd.f32 %v970, %v984
          %v1010 = vadd.f32 %v971, %v984
          %v1011 = vadd.f32 %v972, %v984
          %v1012 = vadd.f32 %v973, %v984
          %v1013 = vadd.f32 %v974, %v984
          %v1014 = vadd.f32 %v975, %v984
          %v1015 = vadd.f32 %v976, %v984
          %v1016 = vadd.f32 %v977, %v984
          %v1017 = vadd.f32 %v978, %v984
          %v1018 = vmax.f32 %v986, 0.0
          %v1019 = vmax.f32 %v987, 0.0
          %v1020 = vmax.f32 %v988, 0.0
          %v1021 = vmax.f32 %v989, 0.0
          %v1022 = vmax.f32 %v990, 0.0
          %v1023 = vmax.f32 %v991, 0.0
          %v1024 = vmax.f32 %v992, 0.0
          %v1025 = vmax.f32 %v993, 0.0
          %v1026 = vmax.f32 %v994, 0.0
          %v1027 = vmax.f32 %v995, 0.0
          %v1028 = vmax.f32 %v996, 0.0
          %v1029 = vmax.f32 %v997, 0.0
          %v1030 = vmax.f32 %v998, 0.0
          %v1031 = vmax.f32 %v999, 0.0
          %v1032 = vmax.f32 %v1000, 0.0
          %v1033 = vmax.f32 %v1001, 0.0
          %v1034 = vmax.f32 %v1002, 0.0
          %v1035 = vmax.f32 %v1003, 0.0
          %v1036 = vmax.f32 %v1004, 0.0
          %v1037 = vmax.f32 %v1005, 0.0
          %v1038 = vmax.f32 %v1006, 0.0
          %v1039 = vmax.f32 %v1007, 0.0
          %v1040 = vmax.f32 %v1008, 0.0
          %v1041 = vmax.f32 %v1009, 0.0
          %v1042 = vmax.f32 %v1010, 0.0
          %v1043 = vmax.f32 %v1011, 0.0
          %v1044 = vmax.f32 %v1012, 0.0
          %v1045 = vmax.f32 %v1013, 0.0
          %v1046 = vmax.f32 %v1014, 0.0
          %v1047 = vmax.f32 %v1015, 0.0
          %v1048 = vmax.f32 %v1016, 0.0
          %v1049 = vmax.f32 %v1017, 0.0
          %v1050 = vpack.c.bf16 %v1019, %v1018
          %v1051 = vpack.c.bf16 %v1021, %v1020
          %v1052 = vpack.c.bf16 %v1023, %v1022
          %v1053 = vpack.c.bf16 %v1025, %v1024
          %v1054 = vpack.c.bf16 %v1027, %v1026
          %v1055 = vpack.c.bf16 %v1029, %v1028
          %v1056 = vpack.c.bf16 %v1031, %v1030
          %v1057 = vpack.c.bf16 %v1033, %v1032
          %v1058 = vpack.c.bf16 %v1035, %v1034
          %v1059 = vpack.c.bf16 %v1037, %v1036
          %v1060 = vpack.c.bf16 %v1039, %v1038
          %v1061 = vpack.c.bf16 %v1041, %v1040
          %v1062 = vpack.c.bf16 %v1043, %v1042
          %v1063 = vpack.c.bf16 %v1045, %v1044
          %v1064 = vpack.c.bf16 %v1047, %v1046
          %v1065 = vpack.c.bf16 %v1049, %v1048
          %v1066 = vld [vmem:[#allocation8] sm:$0xf]
          %v1067 = vld [vmem:[#allocation8 + $0x4] sm:$0xf]
          %v1068 = vld [vmem:[#allocation8 + $0x8] sm:$0xf]
          %v1069 = vld [vmem:[#allocation8 + $0xc] sm:$0xf]
          %v1070 = vld [vmem:[#allocation8 + $0x10] sm:$0xf]
          %v1071 = vld [vmem:[#allocation8 + $0x14] sm:$0xf]
          %v1072 = vld [vmem:[#allocation8 + $0x18] sm:$0xf]
          %v1073 = vld [vmem:[#allocation8 + $0x1c] sm:$0xf]
          %v1074 = vld [vmem:[#allocation8 + $0x20] sm:$0xf]
          %v1075 = vld [vmem:[#allocation8 + $0x24] sm:$0xf]
          %v1076 = vld [vmem:[#allocation8 + $0x28] sm:$0xf]
          %v1077 = vld [vmem:[#allocation8 + $0x2c] sm:$0xf]
          %v1078 = vld [vmem:[#allocation8 + $0x30] sm:$0xf]
          %v1079 = vld [vmem:[#allocation8 + $0x34] sm:$0xf]
          %v1080 = vld [vmem:[#allocation8 + $0x38] sm:$0xf]
          %v1081 = vld [vmem:[#allocation8 + $0x3c] sm:$0xf]
          %v1098 = vunpack.c.l.b16 %v1066
          %v1099 = vunpack.c.l.b16 %v1067
          %v1100 = vunpack.c.l.b16 %v1068
          %v1101 = vunpack.c.l.b16 %v1069
          %v1102 = vunpack.c.l.b16 %v1070
          %v1103 = vunpack.c.l.b16 %v1071
          %v1104 = vunpack.c.l.b16 %v1072
          %v1105 = vunpack.c.l.b16 %v1073
          %v1106 = vunpack.c.l.b16 %v1074
          %v1107 = vunpack.c.l.b16 %v1075
          %v1108 = vunpack.c.l.b16 %v1076
          %v1109 = vunpack.c.l.b16 %v1077
          %v1110 = vunpack.c.l.b16 %v1078
          %v1111 = vunpack.c.l.b16 %v1079
          %v1112 = vunpack.c.l.b16 %v1080
          %v1113 = vunpack.c.l.b16 %v1081
          %v1114 = vpack.c.b16 %v1099, %v1098
          %v1115 = vpack.c.b16 %v1101, %v1100
          %v1116 = vpack.c.b16 %v1103, %v1102
          %v1117 = vpack.c.b16 %v1105, %v1104
          %v1118 = vpack.c.b16 %v1107, %v1106
          %v1119 = vpack.c.b16 %v1109, %v1108
          %v1120 = vpack.c.b16 %v1111, %v1110
          %v1121 = vpack.c.b16 %v1113, %v1112
          %1130 = vmatprep.subr.bf16.mxu0 0
          %1131 = vmatpush1.bf16.msra.mxu0 %v1121
          %1132 = vmatprep.subr.bf16.mxu0 0
          %1133 = vmatpush1.bf16.msra.mxu0 %v1120
          %1134 = vmatprep.subr.bf16.mxu0 0
          %1135 = vmatpush1.bf16.msra.mxu0 %v1119
          %1136 = vmatprep.subr.bf16.mxu0 0
          %1137 = vmatpush1.bf16.msra.mxu0 %v1118
          %1138 = vmatprep.subr.bf16.mxu0 0
          %1139 = vmatpush1.bf16.msra.mxu0 %v1117
          %1140 = vmatprep.subr.bf16.mxu0 0
          %1141 = vmatpush1.bf16.msra.mxu0 %v1116
          %1142 = vmatprep.subr.bf16.mxu0 0
          %1143 = vmatpush1.bf16.msra.mxu0 %v1115
          %1144 = vmatprep.subr.bf16.mxu0 0
          %1145 = vmatpush1.bf16.msra.mxu0 %v1114
          %1146 = vmatprep.subr.bf16.mxu0 0
          %1147 = vmatpush2.bf16.msra.mxu0 0
          %1148 = vmatprep.subr.bf16.mxu0 0
          %1149 = vmatpush2.bf16.msra.mxu0 0
          %1150 = vmatprep.subr.bf16.mxu0 0
          %1151 = vmatpush2.bf16.msra.mxu0 0
          %1152 = vmatprep.subr.bf16.mxu0 0
          %1153 = vmatpush2.bf16.msra.mxu0 0
          %1154 = vmatprep.subr.bf16.mxu0 0
          %1155 = vmatpush2.bf16.msra.mxu0 0
          %1156 = vmatprep.subr.bf16.mxu0 0
          %1157 = vmatpush2.bf16.msra.mxu0 0
          %1158 = vmatprep.subr.bf16.mxu0 0
          %1159 = vmatpush2.bf16.msra.mxu0 0
          %1160 = vmatprep.subr.bf16.mxu0 0
          %1161 = vmatpush2.bf16.msra.mxu0 0
          %1162 = vmatprep.mubr.bf16.mxu0 0
          %1163 = vmatmul.mubr.bf16.gmra.mxu0 %v1050
          %v1164 = vpop.f32.mrf.mxu0
          %v1165 = vadd.f32 0.0, %v1164
          %v1166 = vpop.f32.mrf.mxu0
          %v1167 = vpop.f32.mrf.mxu0
          %v1168 = vadd.f32 0.0, %v1167
          %v1169 = vpop.f32.mrf.mxu0
          %1170 = vmatprep.mubr.bf16.mxu0 0
          %1171 = vmatmul.mubr.bf16.gmra.mxu0 %v1051
          %v1172 = vpop.f32.mrf.mxu0
          %v1173 = vadd.f32 0.0, %v1172
          %v1174 = vpop.f32.mrf.mxu0
          %v1175 = vpop.f32.mrf.mxu0
          %v1176 = vadd.f32 0.0, %v1175
          %v1177 = vpop.f32.mrf.mxu0
          %1178 = vmatprep.mubr.bf16.mxu0 0
          %1179 = vmatmul.mubr.bf16.gmra.mxu0 %v1052
          %v1180 = vpop.f32.mrf.mxu0
          %v1181 = vadd.f32 0.0, %v1180
          %v1182 = vpop.f32.mrf.mxu0
          %v1183 = vpop.f32.mrf.mxu0
          %v1184 = vadd.f32 0.0, %v1183
          %v1185 = vpop.f32.mrf.mxu0
          %1186 = vmatprep.mubr.bf16.mxu0 0
          %1187 = vmatmul.mubr.bf16.gmra.mxu0 %v1053
          %v1188 = vpop.f32.mrf.mxu0
          %v1189 = vadd.f32 0.0, %v1188
          %v1190 = vpop.f32.mrf.mxu0
          %v1191 = vpop.f32.mrf.mxu0
          %v1192 = vadd.f32 0.0, %v1191
          %v1193 = vpop.f32.mrf.mxu0
          %1194 = vmatprep.mubr.bf16.mxu0 0
          %1195 = vmatmul.mubr.bf16.gmra.mxu0 %v1054
          %v1196 = vpop.f32.mrf.mxu0
          %v1197 = vadd.f32 0.0, %v1196
          %v1198 = vpop.f32.mrf.mxu0
          %v1199 = vpop.f32.mrf.mxu0
          %v1200 = vadd.f32 0.0, %v1199
          %v1201 = vpop.f32.mrf.mxu0
          %1202 = vmatprep.mubr.bf16.mxu0 0
          %1203 = vmatmul.mubr.bf16.gmra.mxu0 %v1055
          %v1204 = vpop.f32.mrf.mxu0
          %v1205 = vadd.f32 0.0, %v1204
          %v1206 = vpop.f32.mrf.mxu0
          %v1207 = vpop.f32.mrf.mxu0
          %v1208 = vadd.f32 0.0, %v1207
          %v1209 = vpop.f32.mrf.mxu0
          %1210 = vmatprep.mubr.bf16.mxu0 0
          %1211 = vmatmul.mubr.bf16.gmra.mxu0 %v1056
          %v1212 = vpop.f32.mrf.mxu0
          %v1213 = vadd.f32 0.0, %v1212
          %v1214 = vpop.f32.mrf.mxu0
          %v1215 = vpop.f32.mrf.mxu0
          %v1216 = vadd.f32 0.0, %v1215
          %v1217 = vpop.f32.mrf.mxu0
          %1218 = vmatprep.mubr.bf16.mxu0 0
          %1219 = vmatmul.mubr.bf16.gmra.mxu0 %v1057
          %v1220 = vpop.f32.mrf.mxu0
          %v1221 = vadd.f32 0.0, %v1220
          %v1222 = vpop.f32.mrf.mxu0
          %v1223 = vpop.f32.mrf.mxu0
          %v1224 = vadd.f32 0.0, %v1223
          %v1225 = vpop.f32.mrf.mxu0
          %1226 = vdwg.mxu0
          %v1227 = vpack.c.bf16 %v1168, %v1165
          %v1228 = vpack.c.bf16 %v1176, %v1173
          %v1229 = vpack.c.bf16 %v1184, %v1181
          %v1230 = vpack.c.bf16 %v1192, %v1189
          %v1231 = vpack.c.bf16 %v1200, %v1197
          %v1232 = vpack.c.bf16 %v1208, %v1205
          %v1233 = vpack.c.bf16 %v1216, %v1213
          %v1234 = vpack.c.bf16 %v1224, %v1221
          %v1243 = vunpack.c.l.b16 %v1227
          %v1244 = vunpack.c.h.b16 %v1227
          %v1245 = vunpack.c.l.b16 %v1228
          %v1246 = vunpack.c.h.b16 %v1228
          %v1247 = vunpack.c.l.b16 %v1229
          %v1248 = vunpack.c.h.b16 %v1229
          %v1249 = vunpack.c.l.b16 %v1230
          %v1250 = vunpack.c.h.b16 %v1230
          %v1251 = vunpack.c.l.b16 %v1231
          %v1252 = vunpack.c.h.b16 %v1231
          %v1253 = vunpack.c.l.b16 %v1232
          %v1254 = vunpack.c.h.b16 %v1232
          %v1255 = vunpack.c.l.b16 %v1233
          %v1256 = vunpack.c.h.b16 %v1233
          %v1257 = vunpack.c.l.b16 %v1234
          %v1258 = vunpack.c.h.b16 %v1234
          %v1259 = vpack.c.b16 %v1243, %v1243
          %v1260 = vpack.c.b16 %v1244, %v1244
          %v1261 = vpack.c.b16 %v1245, %v1245
          %v1262 = vpack.c.b16 %v1246, %v1246
          %v1263 = vpack.c.b16 %v1247, %v1247
          %v1264 = vpack.c.b16 %v1248, %v1248
          %v1265 = vpack.c.b16 %v1249, %v1249
          %v1266 = vpack.c.b16 %v1250, %v1250
          %v1267 = vpack.c.b16 %v1251, %v1251
          %v1268 = vpack.c.b16 %v1252, %v1252
          %v1269 = vpack.c.b16 %v1253, %v1253
          %v1270 = vpack.c.b16 %v1254, %v1254
          %v1271 = vpack.c.b16 %v1255, %v1255
          %v1272 = vpack.c.b16 %v1256, %v1256
          %v1273 = vpack.c.b16 %v1257, %v1257
          %v1274 = vpack.c.b16 %v1258, %v1258
          %1291 = vst [vmem:[%s286] sm:$0xf] %v1259
          %1292 = vst [vmem:[%s286 + $0x4] sm:$0xf] %v1260
          %1293 = vst [vmem:[%s286 + $0x8] sm:$0xf] %v1261
          %1294 = vst [vmem:[%s286 + $0xc] sm:$0xf] %v1262
          %1295 = vst [vmem:[%s286 + $0x10] sm:$0xf] %v1263
          %1296 = vst [vmem:[%s286 + $0x14] sm:$0xf] %v1264
          %1297 = vst [vmem:[%s286 + $0x18] sm:$0xf] %v1265
          %1298 = vst [vmem:[%s286 + $0x1c] sm:$0xf] %v1266
          %1299 = vst [vmem:[%s286 + $0x20] sm:$0xf] %v1267
          %1300 = vst [vmem:[%s286 + $0x24] sm:$0xf] %v1268
          %1301 = vst [vmem:[%s286 + $0x28] sm:$0xf] %v1269
          %1302 = vst [vmem:[%s286 + $0x2c] sm:$0xf] %v1270
          %1303 = vst [vmem:[%s286 + $0x30] sm:$0xf] %v1271
          %1304 = vst [vmem:[%s286 + $0x34] sm:$0xf] %v1272
          %1305 = vst [vmem:[%s286 + $0x38] sm:$0xf] %v1273
          %1306 = vst [vmem:[%s286 + $0x3c] sm:$0xf] %v1274
          %v1307 = vld [vmem:[#allocation8] sm:$0xf]
          %v1308 = vld [vmem:[#allocation8 + $0x4] sm:$0xf]
          %v1309 = vld [vmem:[#allocation8 + $0x8] sm:$0xf]
          %v1310 = vld [vmem:[#allocation8 + $0xc] sm:$0xf]
          %v1311 = vld [vmem:[#allocation8 + $0x10] sm:$0xf]
          %v1312 = vld [vmem:[#allocation8 + $0x14] sm:$0xf]
          %v1313 = vld [vmem:[#allocation8 + $0x18] sm:$0xf]
          %v1314 = vld [vmem:[#allocation8 + $0x1c] sm:$0xf]
          %v1315 = vld [vmem:[#allocation8 + $0x20] sm:$0xf]
          %v1316 = vld [vmem:[#allocation8 + $0x24] sm:$0xf]
          %v1317 = vld [vmem:[#allocation8 + $0x28] sm:$0xf]
          %v1318 = vld [vmem:[#allocation8 + $0x2c] sm:$0xf]
          %v1319 = vld [vmem:[#allocation8 + $0x30] sm:$0xf]
          %v1320 = vld [vmem:[#allocation8 + $0x34] sm:$0xf]
          %v1321 = vld [vmem:[#allocation8 + $0x38] sm:$0xf]
          %v1322 = vld [vmem:[#allocation8 + $0x3c] sm:$0xf]
          %v1339 = vunpack.c.l.b16 %v1307
          %v1340 = vunpack.c.l.b16 %v1308
          %v1341 = vunpack.c.l.b16 %v1309
          %v1342 = vunpack.c.l.b16 %v1310
          %v1343 = vunpack.c.l.b16 %v1311
          %v1344 = vunpack.c.l.b16 %v1312
          %v1345 = vunpack.c.l.b16 %v1313
          %v1346 = vunpack.c.l.b16 %v1314
          %v1347 = vunpack.c.l.b16 %v1315
          %v1348 = vunpack.c.l.b16 %v1316
          %v1349 = vunpack.c.l.b16 %v1317
          %v1350 = vunpack.c.l.b16 %v1318
          %v1351 = vunpack.c.l.b16 %v1319
          %v1352 = vunpack.c.l.b16 %v1320
          %v1353 = vunpack.c.l.b16 %v1321
          %v1354 = vunpack.c.l.b16 %v1322
          %v1355 = vpack.c.b16 %v1340, %v1339
          %v1356 = vpack.c.b16 %v1342, %v1341
          %v1357 = vpack.c.b16 %v1344, %v1343
          %v1358 = vpack.c.b16 %v1346, %v1345
          %v1359 = vpack.c.b16 %v1348, %v1347
          %v1360 = vpack.c.b16 %v1350, %v1349
          %v1361 = vpack.c.b16 %v1352, %v1351
          %v1362 = vpack.c.b16 %v1354, %v1353
          %1371 = vmatprep.subr.bf16.mxu0 0
          %1372 = vmatpush1.bf16.msra.mxu0 %v1362
          %1373 = vmatprep.subr.bf16.mxu0 0
          %1374 = vmatpush1.bf16.msra.mxu0 %v1361
          %1375 = vmatprep.subr.bf16.mxu0 0
          %1376 = vmatpush1.bf16.msra.mxu0 %v1360
          %1377 = vmatprep.subr.bf16.mxu0 0
          %1378 = vmatpush1.bf16.msra.mxu0 %v1359
          %1379 = vmatprep.subr.bf16.mxu0 0
          %1380 = vmatpush1.bf16.msra.mxu0 %v1358
          %1381 = vmatprep.subr.bf16.mxu0 0
          %1382 = vmatpush1.bf16.msra.mxu0 %v1357
          %1383 = vmatprep.subr.bf16.mxu0 0
          %1384 = vmatpush1.bf16.msra.mxu0 %v1356
          %1385 = vmatprep.subr.bf16.mxu0 0
          %1386 = vmatpush1.bf16.msra.mxu0 %v1355
          %1387 = vmatprep.subr.bf16.mxu0 0
          %1388 = vmatpush2.bf16.msra.mxu0 0
          %1389 = vmatprep.subr.bf16.mxu0 0
          %1390 = vmatpush2.bf16.msra.mxu0 0
          %1391 = vmatprep.subr.bf16.mxu0 0
          %1392 = vmatpush2.bf16.msra.mxu0 0
          %1393 = vmatprep.subr.bf16.mxu0 0
          %1394 = vmatpush2.bf16.msra.mxu0 0
          %1395 = vmatprep.subr.bf16.mxu0 0
          %1396 = vmatpush2.bf16.msra.mxu0 0
          %1397 = vmatprep.subr.bf16.mxu0 0
          %1398 = vmatpush2.bf16.msra.mxu0 0
          %1399 = vmatprep.subr.bf16.mxu0 0
          %1400 = vmatpush2.bf16.msra.mxu0 0
          %1401 = vmatprep.subr.bf16.mxu0 0
          %1402 = vmatpush2.bf16.msra.mxu0 0
          %1403 = vmatprep.mubr.bf16.mxu0 0
          %1404 = vmatmul.mubr.bf16.gmra.mxu0 %v1058
          %v1405 = vpop.f32.mrf.mxu0
          %v1406 = vadd.f32 0.0, %v1405
          %v1407 = vpop.f32.mrf.mxu0
          %v1408 = vpop.f32.mrf.mxu0
          %v1409 = vadd.f32 0.0, %v1408
          %v1410 = vpop.f32.mrf.mxu0
          %1411 = vmatprep.mubr.bf16.mxu0 0
          %1412 = vmatmul.mubr.bf16.gmra.mxu0 %v1059
          %v1413 = vpop.f32.mrf.mxu0
          %v1414 = vadd.f32 0.0, %v1413
          %v1415 = vpop.f32.mrf.mxu0
          %v1416 = vpop.f32.mrf.mxu0
          %v1417 = vadd.f32 0.0, %v1416
          %v1418 = vpop.f32.mrf.mxu0
          %1419 = vmatprep.mubr.bf16.mxu0 0
          %1420 = vmatmul.mubr.bf16.gmra.mxu0 %v1060
          %v1421 = vpop.f32.mrf.mxu0
          %v1422 = vadd.f32 0.0, %v1421
          %v1423 = vpop.f32.mrf.mxu0
          %v1424 = vpop.f32.mrf.mxu0
          %v1425 = vadd.f32 0.0, %v1424
          %v1426 = vpop.f32.mrf.mxu0
          %1427 = vmatprep.mubr.bf16.mxu0 0
          %1428 = vmatmul.mubr.bf16.gmra.mxu0 %v1061
          %v1429 = vpop.f32.mrf.mxu0
          %v1430 = vadd.f32 0.0, %v1429
          %v1431 = vpop.f32.mrf.mxu0
          %v1432 = vpop.f32.mrf.mxu0
          %v1433 = vadd.f32 0.0, %v1432
          %v1434 = vpop.f32.mrf.mxu0
          %1435 = vmatprep.mubr.bf16.mxu0 0
          %1436 = vmatmul.mubr.bf16.gmra.mxu0 %v1062
          %v1437 = vpop.f32.mrf.mxu0
          %v1438 = vadd.f32 0.0, %v1437
          %v1439 = vpop.f32.mrf.mxu0
          %v1440 = vpop.f32.mrf.mxu0
          %v1441 = vadd.f32 0.0, %v1440
          %v1442 = vpop.f32.mrf.mxu0
          %1443 = vmatprep.mubr.bf16.mxu0 0
          %1444 = vmatmul.mubr.bf16.gmra.mxu0 %v1063
          %v1445 = vpop.f32.mrf.mxu0
          %v1446 = vadd.f32 0.0, %v1445
          %v1447 = vpop.f32.mrf.mxu0
          %v1448 = vpop.f32.mrf.mxu0
          %v1449 = vadd.f32 0.0, %v1448
          %v1450 = vpop.f32.mrf.mxu0
          %1451 = vmatprep.mubr.bf16.mxu0 0
          %1452 = vmatmul.mubr.bf16.gmra.mxu0 %v1064
          %v1453 = vpop.f32.mrf.mxu0
          %v1454 = vadd.f32 0.0, %v1453
          %v1455 = vpop.f32.mrf.mxu0
          %v1456 = vpop.f32.mrf.mxu0
          %v1457 = vadd.f32 0.0, %v1456
          %v1458 = vpop.f32.mrf.mxu0
          %1459 = vmatprep.mubr.bf16.mxu0 0
          %1460 = vmatmul.mubr.bf16.gmra.mxu0 %v1065
          %v1461 = vpop.f32.mrf.mxu0
          %v1462 = vadd.f32 0.0, %v1461
          %v1463 = vpop.f32.mrf.mxu0
          %v1464 = vpop.f32.mrf.mxu0
          %v1465 = vadd.f32 0.0, %v1464
          %v1466 = vpop.f32.mrf.mxu0
          %1467 = vdwg.mxu0
          %v1468 = vpack.c.bf16 %v1409, %v1406
          %v1469 = vpack.c.bf16 %v1417, %v1414
          %v1470 = vpack.c.bf16 %v1425, %v1422
          %v1471 = vpack.c.bf16 %v1433, %v1430
          %v1472 = vpack.c.bf16 %v1441, %v1438
          %v1473 = vpack.c.bf16 %v1449, %v1446
          %v1474 = vpack.c.bf16 %v1457, %v1454
          %v1475 = vpack.c.bf16 %v1465, %v1462
          %v1484 = vunpack.c.l.b16 %v1468
          %v1485 = vunpack.c.h.b16 %v1468
          %v1486 = vunpack.c.l.b16 %v1469
          %v1487 = vunpack.c.h.b16 %v1469
          %v1488 = vunpack.c.l.b16 %v1470
          %v1489 = vunpack.c.h.b16 %v1470
          %v1490 = vunpack.c.l.b16 %v1471
          %v1491 = vunpack.c.h.b16 %v1471
          %v1492 = vunpack.c.l.b16 %v1472
          %v1493 = vunpack.c.h.b16 %v1472
          %v1494 = vunpack.c.l.b16 %v1473
          %v1495 = vunpack.c.h.b16 %v1473
          %v1496 = vunpack.c.l.b16 %v1474
          %v1497 = vunpack.c.h.b16 %v1474
          %v1498 = vunpack.c.l.b16 %v1475
          %v1499 = vunpack.c.h.b16 %v1475
          %v1500 = vpack.c.b16 %v1484, %v1484
          %v1501 = vpack.c.b16 %v1485, %v1485
          %v1502 = vpack.c.b16 %v1486, %v1486
          %v1503 = vpack.c.b16 %v1487, %v1487
          %v1504 = vpack.c.b16 %v1488, %v1488
          %v1505 = vpack.c.b16 %v1489, %v1489
          %v1506 = vpack.c.b16 %v1490, %v1490
          %v1507 = vpack.c.b16 %v1491, %v1491
          %v1508 = vpack.c.b16 %v1492, %v1492
          %v1509 = vpack.c.b16 %v1493, %v1493
          %v1510 = vpack.c.b16 %v1494, %v1494
          %v1511 = vpack.c.b16 %v1495, %v1495
          %v1512 = vpack.c.b16 %v1496, %v1496
          %v1513 = vpack.c.b16 %v1497, %v1497
          %v1514 = vpack.c.b16 %v1498, %v1498
          %v1515 = vpack.c.b16 %v1499, %v1499
          %s1532 = scalar_lea.vmem %s286, 64 [#allocation9]
          %1533 = vst [vmem:[%s1532] sm:$0xf] %v1500
          %1534 = vst [vmem:[%s1532 + $0x4] sm:$0xf] %v1501
          %1535 = vst [vmem:[%s1532 + $0x8] sm:$0xf] %v1502
          %1536 = vst [vmem:[%s1532 + $0xc] sm:$0xf] %v1503
          %1537 = vst [vmem:[%s1532 + $0x10] sm:$0xf] %v1504
          %1538 = vst [vmem:[%s1532 + $0x14] sm:$0xf] %v1505
          %1539 = vst [vmem:[%s1532 + $0x18] sm:$0xf] %v1506
          %1540 = vst [vmem:[%s1532 + $0x1c] sm:$0xf] %v1507
          %1541 = vst [vmem:[%s1532 + $0x20] sm:$0xf] %v1508
          %1542 = vst [vmem:[%s1532 + $0x24] sm:$0xf] %v1509
          %1543 = vst [vmem:[%s1532 + $0x28] sm:$0xf] %v1510
          %1544 = vst [vmem:[%s1532 + $0x2c] sm:$0xf] %v1511
          %1545 = vst [vmem:[%s1532 + $0x30] sm:$0xf] %v1512
          %1546 = vst [vmem:[%s1532 + $0x34] sm:$0xf] %v1513
          %1547 = vst [vmem:[%s1532 + $0x38] sm:$0xf] %v1514
          %1548 = vst [vmem:[%s1532 + $0x3c] sm:$0xf] %v1515
        $region56: #{tpu_custom_call.1} parent=35 // pred_fallthru
          _
        %s1549 = sand.u32 %s133, 1
        %s1550 = scalar_lea.sflag [#allocation5], %s1549
        %s1551 = sand.u32 %s133, 1
        %s1552 = smul.addr %s1551, 128
        %s1553 = scalar_lea.vmem [#allocation9], %s1552
        // Predicated region
        $region57: #{tpu_custom_call.1} parent=35 // pred_check
          %p1554 = pneg %p143
        $region58: #{tpu_custom_call.1} parent=35 // pred_check_branch
          %1556 = sbr.rel (%p1554) target = $region60
        $region59: #{tpu_custom_call.1} parent=35 // pred_region
          #allocation13 [shape = 'u32[6]{0}', space=smem, size = 0x18, scoped, tag = 'DMA stride descriptor']
          %s1557 = smul.u32 16, %s26
          %s1559 = ssub.s32 2048, 2048
          %1560 = vsyncadd %s1550, %s1559
          %s1561 = smul.addr %s1557, 64
          %s1562 = scalar_lea.hbm %s4, %s1561
          %s1564 = sshll.u32 1, 14
          %s1565 = sxor.u32 4294967295, %s1564
          %s1568 = sshll.u32 7, 18
          %s1569 = sxor.u32 4294967295, %s1568
          %s1570 = sand.u32 0, %s1569
          %s1572 = sor.u32 %s1570, 0
          %s1573 = sshll.u32 %s1553, 4
          %s1574 = int_to_ptr.vmem [resolvable:$true] %s1573
          %1580 = sst [smem:[#allocation13]] 1024
          %s1581 = scalar_lea.smem [#allocation13], 1
          %1582 = sst [smem:[%s1581]] 2048
          %s1583 = scalar_lea.smem [#allocation13], 2
          %1584 = sst [smem:[%s1583]] 16
          %s1585 = scalar_lea.smem [#allocation13], 3
          %1586 = sst [smem:[%s1585]] 64
          %s1587 = scalar_lea.smem [#allocation13], 4
          %1588 = sst [smem:[%s1587]] 64
          %s1589 = scalar_lea.smem [#allocation13], 5
          %1590 = sst [smem:[%s1589]] 4
          %1592 = dma.general %s1574, 2048, %s1562, %s1550, 131072, [#allocation13], %s1572, 0
        $region60: #{tpu_custom_call.1} parent=35 // pred_fallthru
          _
      $region36: #{tpu_custom_call.1} parent=5 // pred_fallthru
        _
      %p1593 = scmp.le.s32.totalorder 2, %s17
      // Predicated region
      $region61: #{tpu_custom_call.1} parent=5 // pred_check
        %p1594 = pneg %p1593
      $region62: #{tpu_custom_call.1} parent=5 // pred_check_branch
        %1596 = sbr.rel (%p1594) target = $region64
      $region63: #{tpu_custom_call.1} parent=5 // pred_region
        %s1597 = ssub.s32 %s17, 2
        // Predicated region
        $region65: #{tpu_custom_call.1} parent=63 // pred_check
          %p1598 = pneg %p149
        $region66: #{tpu_custom_call.1} parent=63 // pred_check_branch
          %1600 = sbr.rel (%p1598) target = $region68
        $region67: #{tpu_custom_call.1} parent=63 // pred_region
          %s1601 = sand.u32 %s134, 1
          %s1602 = scalar_lea.sflag [#allocation5], %s1601
          %s1603 = sand.u32 %s134, 1
          %s1604 = smul.addr %s1603, 128
          %s1605 = scalar_lea.vmem [#allocation9], %s1604
          %1606 = dma.done %s1602, 2048
        $region68: #{tpu_custom_call.1} parent=63 // pred_fallthru
          _
      $region64: #{tpu_custom_call.1} parent=5 // pred_fallthru
        _
    $region6: #{tpu_custom_call.1} parent=1 // loop_footer
      %s21 = sadd.s32 1, %s17
    $region7: #{tpu_custom_call.1} parent=1 // loop_footer_branch
      %16 = sbr.rel target = $region3
    $region8: #{tpu_custom_call.1} parent=1 // loop_exit
      _
    %1607 = vsyncpa [#allocation4], 1
    %s1608 = scalar_lea.sflag [#allocation4], 1
    %1609 = vsyncpa %s1608, 1
    %1610 = vsyncpa [#allocation7], 1
    %1611 = vsyncpa [#allocation5], 1
    %s1612 = scalar_lea.sflag [#allocation5], 1
    %1613 = vsyncpa %s1612, 1

</llo_original>
